<compile_context>
chip_gen: v7x
topology: tpu7x:2x2x1
jax: 0.10.0
libtpu: 0.0.40
codegen_flags: <defaults>
</compile_context>

<pallas_src>
import functools

import jax
import jax.numpy as jnp
import numpy as np
from jax.experimental import pallas as pl
from jax.experimental.pallas import tpu as pltpu


# --------------------------- fused Pallas kernel --------------------------- #

def _memory_fused_kernel(x_ref, ptab_ref, coef_ref, out_ref, *, meta):
    """Whole Memory.forward (all memory banks + attention) in one program.

    x_ref    : (B, memory_width)               f32
    ptab_ref : (n_banks * R, B, Wk)            f32  packed constant tables
    coef_ref : (n_banks, Wk, out_max)          f32  fused spline+base coefs
    out_ref  : (B, 128)                        f32  lane-dense output slab
    """
    k = meta['k']
    in_dims = meta['in_dims']
    out_dims = meta['out_dims']
    R = meta['rows_per_bank']
    Wk = meta['w_kernel']
    mask_base = 2 + 3 * k
    put_row = mask_base + meta['in_dim_max']
    n_banks = len(in_dims)

    x = x_ref[...]                                    # (B, memory_width)

    # One full zeroing store for the pad lanes; per-bank results are written
    # into static lane slices below (no chained lane-concats).
    out_ref[...] = jnp.zeros(out_ref.shape, jnp.float32)

    col = 0
    prev = None
    for bi in range(n_banks):
        base = bi * R
        in_dim = in_dims[bi]
        out_dim = out_dims[bi]

        # Input columns for this bank (no lane-concat needed: the MAC below
        # consumes columns directly).
        if bi == 0:
            cols = [x[:, 0:1]]
        elif bi < n_banks - 1:
            cols = [x[:, bi:bi + 1]] + [prev[:, j:j + 1]
                                        for j in range(prev.shape[1])]
        else:
            cols = [prev[:, j:j + 1] for j in range(prev.shape[1])]
        assert len(cols) == in_dim

        # Block-repeat each input column across its L0 basis lanes with a VPU
        # broadcast+mask MAC (masks are pre-broadcast (B, Wk) tiles) -> no MXU
        # push/pop on the serial critical path for this step.
        xr = cols[0] * ptab_ref[base + mask_base]
        for i in range(1, in_dim):
            xr = xr + cols[i] * ptab_ref[base + mask_base + i]

        # Degree-0 bases (half-open cells, matches the reference).
        g_lo = ptab_ref[base + 0]                     # knots[j]
        g_1 = ptab_ref[base + 1]                      # knots[j+1]
        b = jnp.where((xr >= g_lo) & (xr < g_1), 1.0, 0.0)
        x_minus_lo = xr - g_lo

        # Cox-de Boor recursion, vectorized over in_dim along lanes.
        # Denominators are precomputed reciprocals -> no vector divides.
        # b[j+1] is a full-lane rotate; wrap / cross-block contamination only
        # ever lands in zero-coef pad lanes (ncoef == L0 - k, asserted).
        for d in range(1, k + 1):
            r = base + 2 + 3 * (d - 1)
            g_hi = ptab_ref[r]                        # knots[j+d+1]
            lrec = ptab_ref[r + 1]                    # 1/(knots[j+d]  -knots[j])
            rrec = ptab_ref[r + 2]                    # 1/(knots[j+d+1]-knots[j+1])
            b_up = pltpu.roll(b, shift=Wk - 1, axis=1)  # b_up[j] = b[(j+1)%Wk]
            b = x_minus_lo * lrec * b + (g_hi - xr) * rrec * b_up

        # Fold the identity-base term into the single matmul: overwrite the
        # per-block base lane with the raw input (xr equals the input column
        # everywhere inside its block); the matching coef row holds scale_base.
        put = ptab_ref[base + put_row]
        b = jnp.where(put > 0.0, xr, b)

        # One fused MXU dot per bank: spline term + base term together.
        out = jnp.dot(b, coef_ref[bi], preferred_element_type=jnp.float32)
        out = out[:, :out_dim]

        out_ref[:, col:col + out_dim] = out           # static lane-slice store
        col += out_dim
        prev = out


# -------------------- host-side parameter preparation ---------------------- #

def prepare_fused_params(knots, banks, *, k, batch_pad=8):
    """Done once.  Packs, per bank:
      rows 0..1        : knots[j], knots[j+1]
      rows 2..2+3k-1   : per degree d: knots[j+d+1], 1/lden, 1/rden
      rows ..+in_max-1 : 0/1 block-repeat MAC masks (one per input column)
      last row         : 0/1 'put' mask selecting the base lane of each block
    every row pre-broadcast across `batch_pad` sublanes, all banks stacked into
    one array.  Coefficients are scale_sp-folded with scale_base embedded at
    the put lanes, zero-padded elsewhere, stacked into a second array.
    """
    knots = np.asarray(knots, np.float64)
    n = knots.shape[0]
    L0 = n - 1
    in_dims = [np.asarray(p['coef']).shape[0] for p in banks]
    out_dims = [np.asarray(p['coef']).shape[2] for p in banks]
    ncoef = np.asarray(banks[0]['coef']).shape[1]
    for p in banks:
        assert np.asarray(p['coef']).shape[1] == ncoef
    # Safety invariant for the in-kernel lane rotate: contamination propagates
    # at most k lanes and must stay inside the zero-coef pad lanes.
    assert ncoef == L0 - k, (ncoef, L0, k)

    in_dim_max = max(in_dims)
    out_max = max(out_dims)
    w_valid = in_dim_max * L0
    w_kernel = ((w_valid + 127) // 128) * 128          # full-vreg lane width

    # Per-block constant pattern (length L0); pad values must stay finite.
    j = np.arange(L0)
    kn = lambda idx: knots[np.minimum(idx, n - 1)]
    pat = [kn(j), kn(j + 1)]
    pad_vals = [0.0, 0.0]
    for d in range(1, k + 1):
        lden = kn(j + d) - kn(j)
        rden = kn(j + d + 1) - kn(j + 1)
        pat += [kn(j + d + 1),
                1.0 / np.where(lden != 0.0, lden, 1.0),
                1.0 / np.where(rden != 0.0, rden, 1.0)]
        pad_vals += [0.0, 1.0, 1.0]

    n_banks = len(banks)
    rows_per_bank = 2 + 3 * k + in_dim_max + 1
    ptab = np.zeros((n_banks, rows_per_bank, w_kernel), np.float64)
    coef_all = np.zeros((n_banks, w_kernel, out_max), np.float64)

    for bi, p in enumerate(banks):
        coef = np.asarray(p['coef'], np.float64)       # (I, ncoef, O)
        sb = np.asarray(p['scale_base'], np.float64)
        ss = np.asarray(p['scale_sp'], np.float64)
        in_dim, _, out_dim = coef.shape
        # knot / reciprocal rows: tile the block pattern, benign finite tail
        for r, (row_pat, pv) in enumerate(zip(pat, pad_vals)):
            full = np.full((w_kernel,), pv, np.float64)
            full[:w_valid] = np.tile(row_pat, in_dim_max)
            ptab[bi, r, :] = full
        # MAC masks + put mask, fused coefficients
        for i in range(in_dim):
            ptab[bi, 2 + 3 * k + i, i * L0:(i + 1) * L0] = 1.0
            ptab[bi, 2 + 3 * k + in_dim_max, i * L0 + ncoef] = 1.0
            coef_all[bi, i * L0:i * L0 + ncoef, :out_dim] = ss[i][None, :] * coef[i]
            coef_all[bi, i * L0 + ncoef, :out_dim] = sb[i]

    assert np.isfinite(ptab).all() and np.isfinite(coef_all).all()

    # Pre-broadcast every table row across batch sublanes (kills all in-kernel
    # sublane broadcasts), then flatten banks x rows into one leading axis.
    ptab_b = np.broadcast_to(
        ptab[:, :, None, :].astype(np.float32),
        (n_banks, rows_per_bank, batch_pad, w_kernel))
    ptab_b = np.ascontiguousarray(ptab_b).reshape(
        n_banks * rows_per_bank, batch_pad, w_kernel)

    meta = dict(k=k, in_dims=tuple(in_dims), out_dims=tuple(out_dims),
                rows_per_bank=rows_per_bank, in_dim_max=in_dim_max,
                out_max=out_max, w_kernel=w_kernel, batch_pad=batch_pad,
                L0=L0, ncoef=ncoef)
    return jnp.asarray(ptab_b), jnp.asarray(coef_all.astype(np.float32)), meta


def memory_forward_pallas(x, ptab, coef, meta):
    assert x.ndim < 3
    if x.ndim == 1:
        x = x[None, :]
    n_banks = len(meta['in_dims'])
    assert x.shape[-1] == n_banks - 1
    bsz = x.shape[0]
    B = meta['batch_pad']
    assert bsz <= B, 'prepare_fused_params with a larger batch_pad'
    if bsz < B:
        x = jnp.concatenate(
            [x, jnp.zeros((B - bsz, x.shape[1]), x.dtype)], axis=0)

    hid_total = sum(meta['out_dims'][:-1])
    att_dim = meta['out_dims'][-1]
    out_width = ((hid_total + att_dim + 127) // 128) * 128   # lane-dense slab

    vmem = pl.BlockSpec(memory_space=pltpu.MemorySpace.VMEM)
    slab = pl.pallas_call(
        functools.partial(_memory_fused_kernel, meta=meta),
        in_specs=[vmem, vmem, vmem],
        out_specs=vmem,
        out_shape=jax.ShapeDtypeStruct((B, out_width), jnp.float32),
    )(x.astype(jnp.float32), ptab, coef)
    return slab[:bsz, :hid_total], slab[:bsz, hid_total:hid_total + att_dim]


# -------------------------- pure-JAX reference ------------------------------ #

def kan_layer_ref(x, knots, coef, sb, ss, *, k):
    xg = x[:, :, None]
    g = knots[None, :, :]
    b = ((xg >= g[:, :, :-1]) & (xg < g[:, :, 1:])).astype(jnp.float32)
    for d in range(1, k + 1):
        b = ((xg - g[:, :, :-(d + 1)]) / (g[:, :, d:-1] - g[:, :, :-(d + 1)])
             * b[:, :, :-1]
             + (g[:, :, d + 1:] - xg) / (g[:, :, d + 1:] - g[:, :, 1:-d])
             * b[:, :, 1:])
    spl = jnp.einsum('bic,ico->bio', b, coef)
    return jnp.sum(sb[None] * x[:, :, None] + ss[None] * spl, axis=1)


def memory_forward_ref(x, knots, banks, *, k):
    if x.ndim == 1:
        x = x[None, :]
    kt = jnp.asarray(knots, jnp.float32)
    pieces, prev = [], None
    for i, p in enumerate(banks[:-1]):
        xi = x[:, i:i + 1]
        hid = xi if prev is None else jnp.concatenate([xi, prev], axis=-1)
        tiled = jnp.tile(kt[None, :], (p['coef'].shape[0], 1))
        out = kan_layer_ref(hid, tiled, p['coef'], p['scale_base'],
                            p['scale_sp'], k=k)
        pieces.append(out)
        prev = out
    p = banks[-1]
    tiled = jnp.tile(kt[None, :], (p['coef'].shape[0], 1))
    att = kan_layer_ref(prev, tiled, p['coef'], p['scale_base'],
                        p['scale_sp'], k=k)
    return jnp.hstack(pieces), att


# ----------------------------- parameter init ------------------------------- #

def init_memory_params(key, banks_sizes, *, grid_size, k, grid_range,
                       noise_scale):
    h = (grid_range[1] - grid_range[0]) / grid_size
    knots = (grid_range[0]
             + h * np.arange(-k, grid_size + k + 1)).astype(np.float32)
    banks = []
    for in_dim, out_dim in banks_sizes:
        key, k1, k2 = jax.random.split(key, 3)
        banks.append(dict(
            coef=(noise_scale * jax.random.normal(
                k1, (in_dim, grid_size + k, out_dim))).astype(jnp.float32),
            scale_base=(jax.random.uniform(k2, (in_dim, out_dim),
                                           minval=-0.5, maxval=0.5)
                        / np.sqrt(in_dim)).astype(jnp.float32),
            scale_sp=jnp.full((in_dim, out_dim), 1.0 / np.sqrt(in_dim),
                              jnp.float32),
        ))
    return knots, banks


# ---------------------------------- main ------------------------------------ #

if __name__ == "__main__":
    GRID_SIZE = 5
    SPLINE_ORDER = 3
    NOISE_SCALE = 0.1
    GRID_RANGE = (-1.0, 1.0)

    # banks_sizes consistent with Memory.forward's chaining:
    #   bank0: 1 -> 4, bank1: 1+4 -> 4, bank2: 1+4 -> 4, attention bank: 4 -> 2
    banks_sizes = [(1, 4), (5, 4), (5, 4), (4, 2)]
    memory_width = len(banks_sizes) - 1            # = 3
    batch = 8

    root = jax.random.PRNGKey(0)
    knots, banks = init_memory_params(root, banks_sizes, grid_size=GRID_SIZE,
                                      k=SPLINE_ORDER, grid_range=GRID_RANGE,
                                      noise_scale=NOISE_SCALE)
    ptab, coef, meta = prepare_fused_params(knots, banks, k=SPLINE_ORDER,
                                            batch_pad=batch)

    x = jax.random.uniform(jax.random.PRNGKey(1), (batch, memory_width),
                           minval=-1.0, maxval=1.0, dtype=jnp.float32)

    hidden, attention = memory_forward_pallas(x, ptab, coef, meta)
    jax.block_until_ready((hidden, attention))

    hidden_ref, attention_ref = memory_forward_ref(x, knots, banks,
                                                   k=SPLINE_ORDER)
    np.testing.assert_allclose(np.asarray(hidden), np.asarray(hidden_ref),
                               rtol=1e-5, atol=1e-5)
    np.testing.assert_allclose(np.asarray(attention), np.asarray(attention_ref),
                               rtol=1e-5, atol=1e-5)

    assert hidden.shape == (batch, sum(bs[1] for bs in banks_sizes[:-1]))
    assert attention.shape == (batch, banks_sizes[-1][1])
    print("KERNEL_OK")
</pallas_src>

<mosaic_0001>
module attributes {stable_mosaic.version = 11 : i64} {
  func.func @_memory_fused_kernel(%arg0: memref<8x3xf32, #tpu.memory_space<vmem>>, %arg1: memref<68x8x128xf32, #tpu.memory_space<vmem>>, %arg2: memref<4x128x4xf32, #tpu.memory_space<vmem>>, %arg3: memref<8x128xf32, #tpu.memory_space<vmem>>) attributes {dimension_semantics = [], scalar_prefetch = 0 : i64, scratch_operands = 0 : i64, tpu.core_type = #tpu.core_type<tc>} {
    %c0 = arith.constant 0 : index
    %c0_0 = arith.constant 0 : index
    %0 = vector.load %arg0[%c0, %c0_0] : memref<8x3xf32, #tpu.memory_space<vmem>>, vector<8x3xf32>
    %cst = arith.constant 0.000000e+00 : f32
    %1 = vector.broadcast %cst : f32 to vector<8x128xf32>
    %c0_1 = arith.constant 0 : index
    %c0_2 = arith.constant 0 : index
    %2 = vector.load %arg3[%c0_1, %c0_2] : memref<8x128xf32, #tpu.memory_space<vmem>>, vector<8x128xf32>
    tpu.vector_store %arg3[%c0_1, %c0_2], %1 {strides = array<i32>} : memref<8x128xf32, #tpu.memory_space<vmem>>, vector<8x128xf32>,
    %3 = vector.extract_strided_slice %0 {offsets = [0, 0], sizes = [8, 1], strides = [1, 1]} : vector<8x3xf32> to vector<8x1xf32>
    %c11 = arith.constant 11 : index
    %c0_3 = arith.constant 0 : index
    %c0_4 = arith.constant 0 : index
    %4 = vector.load %arg1[%c11, %c0_3, %c0_4] : memref<68x8x128xf32, #tpu.memory_space<vmem>>, vector<1x8x128xf32>
    %5 = vector.shape_cast %4 : vector<1x8x128xf32> to vector<8x128xf32>
    %6 = vector.broadcast %3 : vector<8x1xf32> to vector<8x128xf32>
    %7 = arith.mulf %6, %5 : vector<8x128xf32>
    %c0_5 = arith.constant 0 : index
    %c0_6 = arith.constant 0 : index
    %c0_7 = arith.constant 0 : index
    %8 = vector.load %arg1[%c0_5, %c0_6, %c0_7] : memref<68x8x128xf32, #tpu.memory_space<vmem>>, vector<1x8x128xf32>
    %9 = vector.shape_cast %8 : vector<1x8x128xf32> to vector<8x128xf32>
    %c1 = arith.constant 1 : index
    %c0_8 = arith.constant 0 : index
    %c0_9 = arith.constant 0 : index
    %10 = vector.load %arg1[%c1, %c0_8, %c0_9] : memref<68x8x128xf32, #tpu.memory_space<vmem>>, vector<1x8x128xf32>
    %11 = vector.shape_cast %10 : vector<1x8x128xf32> to vector<8x128xf32>
    %12 = arith.cmpf oge, %7, %9 : vector<8x128xf32>
    %13 = arith.cmpf olt, %7, %11 : vector<8x128xf32>
    %14 = arith.andi %12, %13 : vector<8x128xi1>
    %cst_10 = arith.constant 1.000000e+00 : f32
    %cst_11 = arith.constant 0.000000e+00 : f32
    %15 = vector.broadcast %cst_10 : f32 to vector<8x128xf32>
    %16 = vector.broadcast %cst_11 : f32 to vector<8x128xf32>
    %17 = arith.select %14, %15, %16 : vector<8x128xi1>, vector<8x128xf32>
    %18 = arith.subf %7, %9 : vector<8x128xf32>
    %c2 = arith.constant 2 : index
    %c0_12 = arith.constant 0 : index
    %c0_13 = arith.constant 0 : index
    %19 = vector.load %arg1[%c2, %c0_12, %c0_13] : memref<68x8x128xf32, #tpu.memory_space<vmem>>, vector<1x8x128xf32>
    %20 = vector.shape_cast %19 : vector<1x8x128xf32> to vector<8x128xf32>
    %c3 = arith.constant 3 : index
    %c0_14 = arith.constant 0 : index
    %c0_15 = arith.constant 0 : index
    %21 = vector.load %arg1[%c3, %c0_14, %c0_15] : memref<68x8x128xf32, #tpu.memory_space<vmem>>, vector<1x8x128xf32>
    %22 = vector.shape_cast %21 : vector<1x8x128xf32> to vector<8x128xf32>
    %c4 = arith.constant 4 : index
    %c0_16 = arith.constant 0 : index
    %c0_17 = arith.constant 0 : index
    %23 = vector.load %arg1[%c4, %c0_16, %c0_17] : memref<68x8x128xf32, #tpu.memory_space<vmem>>, vector<1x8x128xf32>
    %24 = vector.shape_cast %23 : vector<1x8x128xf32> to vector<8x128xf32>
    %c127_i32 = arith.constant 127 : i32
    %25 = tpu.dynamic_rotate %17 by %c127_i32 dim 1 : vector<8x128xf32>, i32 -> vector<8x128xf32>
    %26 = arith.mulf %18, %22 : vector<8x128xf32>
    %27 = arith.mulf %26, %17 : vector<8x128xf32>
    %28 = arith.subf %20, %7 : vector<8x128xf32>
    %29 = arith.mulf %28, %24 : vector<8x128xf32>
    %30 = arith.mulf %29, %25 : vector<8x128xf32>
    %31 = arith.addf %27, %30 : vector<8x128xf32>
    %c5 = arith.constant 5 : index
    %c0_18 = arith.constant 0 : index
    %c0_19 = arith.constant 0 : index
    %32 = vector.load %arg1[%c5, %c0_18, %c0_19] : memref<68x8x128xf32, #tpu.memory_space<vmem>>, vector<1x8x128xf32>
    %33 = vector.shape_cast %32 : vector<1x8x128xf32> to vector<8x128xf32>
    %c6 = arith.constant 6 : index
    %c0_20 = arith.constant 0 : index
    %c0_21 = arith.constant 0 : index
    %34 = vector.load %arg1[%c6, %c0_20, %c0_21] : memref<68x8x128xf32, #tpu.memory_space<vmem>>, vector<1x8x128xf32>
    %35 = vector.shape_cast %34 : vector<1x8x128xf32> to vector<8x128xf32>
    %c7 = arith.constant 7 : index
    %c0_22 = arith.constant 0 : index
    %c0_23 = arith.constant 0 : index
    %36 = vector.load %arg1[%c7, %c0_22, %c0_23] : memref<68x8x128xf32, #tpu.memory_space<vmem>>, vector<1x8x128xf32>
    %37 = vector.shape_cast %36 : vector<1x8x128xf32> to vector<8x128xf32>
    %c127_i32_24 = arith.constant 127 : i32
    %38 = tpu.dynamic_rotate %31 by %c127_i32_24 dim 1 : vector<8x128xf32>, i32 -> vector<8x128xf32>
    %39 = arith.mulf %18, %35 : vector<8x128xf32>
    %40 = arith.mulf %39, %31 : vector<8x128xf32>
    %41 = arith.subf %33, %7 : vector<8x128xf32>
    %42 = arith.mulf %41, %37 : vector<8x128xf32>
    %43 = arith.mulf %42, %38 : vector<8x128xf32>
    %44 = arith.addf %40, %43 : vector<8x128xf32>
    %c8 = arith.constant 8 : index
    %c0_25 = arith.constant 0 : index
    %c0_26 = arith.constant 0 : index
    %45 = vector.load %arg1[%c8, %c0_25, %c0_26] : memref<68x8x128xf32, #tpu.memory_space<vmem>>, vector<1x8x128xf32>
    %46 = vector.shape_cast %45 : vector<1x8x128xf32> to vector<8x128xf32>
    %c9 = arith.constant 9 : index
    %c0_27 = arith.constant 0 : index
    %c0_28 = arith.constant 0 : index
    %47 = vector.load %arg1[%c9, %c0_27, %c0_28] : memref<68x8x128xf32, #tpu.memory_space<vmem>>, vector<1x8x128xf32>
    %48 = vector.shape_cast %47 : vector<1x8x128xf32> to vector<8x128xf32>
    %c10 = arith.constant 10 : index
    %c0_29 = arith.constant 0 : index
    %c0_30 = arith.constant 0 : index
    %49 = vector.load %arg1[%c10, %c0_29, %c0_30] : memref<68x8x128xf32, #tpu.memory_space<vmem>>, vector<1x8x128xf32>
    %50 = vector.shape_cast %49 : vector<1x8x128xf32> to vector<8x128xf32>
    %c127_i32_31 = arith.constant 127 : i32
    %51 = tpu.dynamic_rotate %44 by %c127_i32_31 dim 1 : vector<8x128xf32>, i32 -> vector<8x128xf32>
    %52 = arith.mulf %18, %48 : vector<8x128xf32>
    %53 = arith.mulf %52, %44 : vector<8x128xf32>
    %54 = arith.subf %46, %7 : vector<8x128xf32>
    %55 = arith.mulf %54, %50 : vector<8x128xf32>
    %56 = arith.mulf %55, %51 : vector<8x128xf32>
    %57 = arith.addf %53, %56 : vector<8x128xf32>
    %c16 = arith.constant 16 : index
    %c0_32 = arith.constant 0 : index
    %c0_33 = arith.constant 0 : index
    %58 = vector.load %arg1[%c16, %c0_32, %c0_33] : memref<68x8x128xf32, #tpu.memory_space<vmem>>, vector<1x8x128xf32>
    %59 = vector.shape_cast %58 : vector<1x8x128xf32> to vector<8x128xf32>
    %cst_34 = arith.constant 0.000000e+00 : f32
    %60 = vector.broadcast %cst_34 : f32 to vector<8x128xf32>
    %61 = arith.cmpf ogt, %59, %60 : vector<8x128xf32>
    %62 = arith.select %61, %7, %57 : vector<8x128xi1>, vector<8x128xf32>
    %c0_35 = arith.constant 0 : index
    %c0_36 = arith.constant 0 : index
    %c0_37 = arith.constant 0 : index
    %63 = vector.load %arg2[%c0_35, %c0_36, %c0_37] : memref<4x128x4xf32, #tpu.memory_space<vmem>>, vector<1x128x4xf32>
    %64 = vector.shape_cast %63 : vector<1x128x4xf32> to vector<128x4xf32>
    %cst_38 = arith.constant dense<0.000000e+00> : vector<8x4xf32>
    %65 = tpu.matmul %62, %64, %cst_38 {dimension_numbers = #tpu.dot_dimension_numbers<[1], [0], [0], [1], [0, 0, 1, 1], [], []>} : vector<8x128xf32>, vector<128x4xf32>, vector<8x4xf32> -> vector<8x4xf32>
    %c0_39 = arith.constant 0 : index
    %c0_40 = arith.constant 0 : index
    %66 = vector.load %arg3[%c0_39, %c0_40] : memref<8x128xf32, #tpu.memory_space<vmem>>, vector<8x4xf32>
    tpu.vector_store %arg3[%c0_39, %c0_40], %65 {strides = array<i32>} : memref<8x128xf32, #tpu.memory_space<vmem>>, vector<8x4xf32>,
    %67 = vector.extract_strided_slice %0 {offsets = [0, 1], sizes = [8, 1], strides = [1, 1]} : vector<8x3xf32> to vector<8x1xf32>
    %68 = vector.extract_strided_slice %65 {offsets = [0, 0], sizes = [8, 1], strides = [1, 1]} : vector<8x4xf32> to vector<8x1xf32>
    %69 = vector.extract_strided_slice %65 {offsets = [0, 1], sizes = [8, 1], strides = [1, 1]} : vector<8x4xf32> to vector<8x1xf32>
    %70 = vector.extract_strided_slice %65 {offsets = [0, 2], sizes = [8, 1], strides = [1, 1]} : vector<8x4xf32> to vector<8x1xf32>
    %71 = vector.extract_strided_slice %65 {offsets = [0, 3], sizes = [8, 1], strides = [1, 1]} : vector<8x4xf32> to vector<8x1xf32>
    %c28 = arith.constant 28 : index
    %c0_41 = arith.constant 0 : index
    %c0_42 = arith.constant 0 : index
    %72 = vector.load %arg1[%c28, %c0_41, %c0_42] : memref<68x8x128xf32, #tpu.memory_space<vmem>>, vector<1x8x128xf32>
    %73 = vector.shape_cast %72 : vector<1x8x128xf32> to vector<8x128xf32>
    %74 = vector.broadcast %67 : vector<8x1xf32> to vector<8x128xf32>
    %75 = arith.mulf %74, %73 : vector<8x128xf32>
    %c29 = arith.constant 29 : index
    %c0_43 = arith.constant 0 : index
    %c0_44 = arith.constant 0 : index
    %76 = vector.load %arg1[%c29, %c0_43, %c0_44] : memref<68x8x128xf32, #tpu.memory_space<vmem>>, vector<1x8x128xf32>
    %77 = vector.shape_cast %76 : vector<1x8x128xf32> to vector<8x128xf32>
    %78 = vector.broadcast %68 : vector<8x1xf32> to vector<8x128xf32>
    %79 = arith.mulf %78, %77 : vector<8x128xf32>
    %80 = arith.addf %75, %79 : vector<8x128xf32>
    %c30 = arith.constant 30 : index
    %c0_45 = arith.constant 0 : index
    %c0_46 = arith.constant 0 : index
    %81 = vector.load %arg1[%c30, %c0_45, %c0_46] : memref<68x8x128xf32, #tpu.memory_space<vmem>>, vector<1x8x128xf32>
    %82 = vector.shape_cast %81 : vector<1x8x128xf32> to vector<8x128xf32>
    %83 = vector.broadcast %69 : vector<8x1xf32> to vector<8x128xf32>
    %84 = arith.mulf %83, %82 : vector<8x128xf32>
    %85 = arith.addf %80, %84 : vector<8x128xf32>
    %c31 = arith.constant 31 : index
    %c0_47 = arith.constant 0 : index
    %c0_48 = arith.constant 0 : index
    %86 = vector.load %arg1[%c31, %c0_47, %c0_48] : memref<68x8x128xf32, #tpu.memory_space<vmem>>, vector<1x8x128xf32>
    %87 = vector.shape_cast %86 : vector<1x8x128xf32> to vector<8x128xf32>
    %88 = vector.broadcast %70 : vector<8x1xf32> to vector<8x128xf32>
    %89 = arith.mulf %88, %87 : vector<8x128xf32>
    %90 = arith.addf %85, %89 : vector<8x128xf32>
    %c32 = arith.constant 32 : index
    %c0_49 = arith.constant 0 : index
    %c0_50 = arith.constant 0 : index
    %91 = vector.load %arg1[%c32, %c0_49, %c0_50] : memref<68x8x128xf32, #tpu.memory_space<vmem>>, vector<1x8x128xf32>
    %92 = vector.shape_cast %91 : vector<1x8x128xf32> to vector<8x128xf32>
    %93 = vector.broadcast %71 : vector<8x1xf32> to vector<8x128xf32>
    %94 = arith.mulf %93, %92 : vector<8x128xf32>
    %95 = arith.addf %90, %94 : vector<8x128xf32>
    %c17 = arith.constant 17 : index
    %c0_51 = arith.constant 0 : index
    %c0_52 = arith.constant 0 : index
    %96 = vector.load %arg1[%c17, %c0_51, %c0_52] : memref<68x8x128xf32, #tpu.memory_space<vmem>>, vector<1x8x128xf32>
    %97 = vector.shape_cast %96 : vector<1x8x128xf32> to vector<8x128xf32>
    %c18 = arith.constant 18 : index
    %c0_53 = arith.constant 0 : index
    %c0_54 = arith.constant 0 : index
    %98 = vector.load %arg1[%c18, %c0_53, %c0_54] : memref<68x8x128xf32, #tpu.memory_space<vmem>>, vector<1x8x128xf32>
    %99 = vector.shape_cast %98 : vector<1x8x128xf32> to vector<8x128xf32>
    %100 = arith.cmpf oge, %95, %97 : vector<8x128xf32>
    %101 = arith.cmpf olt, %95, %99 : vector<8x128xf32>
    %102 = arith.andi %100, %101 : vector<8x128xi1>
    %cst_55 = arith.constant 1.000000e+00 : f32
    %cst_56 = arith.constant 0.000000e+00 : f32
    %103 = vector.broadcast %cst_55 : f32 to vector<8x128xf32>
    %104 = vector.broadcast %cst_56 : f32 to vector<8x128xf32>
    %105 = arith.select %102, %103, %104 : vector<8x128xi1>, vector<8x128xf32>
    %106 = arith.subf %95, %97 : vector<8x128xf32>
    %c19 = arith.constant 19 : index
    %c0_57 = arith.constant 0 : index
    %c0_58 = arith.constant 0 : index
    %107 = vector.load %arg1[%c19, %c0_57, %c0_58] : memref<68x8x128xf32, #tpu.memory_space<vmem>>, vector<1x8x128xf32>
    %108 = vector.shape_cast %107 : vector<1x8x128xf32> to vector<8x128xf32>
    %c20 = arith.constant 20 : index
    %c0_59 = arith.constant 0 : index
    %c0_60 = arith.constant 0 : index
    %109 = vector.load %arg1[%c20, %c0_59, %c0_60] : memref<68x8x128xf32, #tpu.memory_space<vmem>>, vector<1x8x128xf32>
    %110 = vector.shape_cast %109 : vector<1x8x128xf32> to vector<8x128xf32>
    %c21 = arith.constant 21 : index
    %c0_61 = arith.constant 0 : index
    %c0_62 = arith.constant 0 : index
    %111 = vector.load %arg1[%c21, %c0_61, %c0_62] : memref<68x8x128xf32, #tpu.memory_space<vmem>>, vector<1x8x128xf32>
    %112 = vector.shape_cast %111 : vector<1x8x128xf32> to vector<8x128xf32>
    %c127_i32_63 = arith.constant 127 : i32
    %113 = tpu.dynamic_rotate %105 by %c127_i32_63 dim 1 : vector<8x128xf32>, i32 -> vector<8x128xf32>
    %114 = arith.mulf %106, %110 : vector<8x128xf32>
    %115 = arith.mulf %114, %105 : vector<8x128xf32>
    %116 = arith.subf %108, %95 : vector<8x128xf32>
    %117 = arith.mulf %116, %112 : vector<8x128xf32>
    %118 = arith.mulf %117, %113 : vector<8x128xf32>
    %119 = arith.addf %115, %118 : vector<8x128xf32>
    %c22 = arith.constant 22 : index
    %c0_64 = arith.constant 0 : index
    %c0_65 = arith.constant 0 : index
    %120 = vector.load %arg1[%c22, %c0_64, %c0_65] : memref<68x8x128xf32, #tpu.memory_space<vmem>>, vector<1x8x128xf32>
    %121 = vector.shape_cast %120 : vector<1x8x128xf32> to vector<8x128xf32>
    %c23 = arith.constant 23 : index
    %c0_66 = arith.constant 0 : index
    %c0_67 = arith.constant 0 : index
    %122 = vector.load %arg1[%c23, %c0_66, %c0_67] : memref<68x8x128xf32, #tpu.memory_space<vmem>>, vector<1x8x128xf32>
    %123 = vector.shape_cast %122 : vector<1x8x128xf32> to vector<8x128xf32>
    %c24 = arith.constant 24 : index
    %c0_68 = arith.constant 0 : index
    %c0_69 = arith.constant 0 : index
    %124 = vector.load %arg1[%c24, %c0_68, %c0_69] : memref<68x8x128xf32, #tpu.memory_space<vmem>>, vector<1x8x128xf32>
    %125 = vector.shape_cast %124 : vector<1x8x128xf32> to vector<8x128xf32>
    %c127_i32_70 = arith.constant 127 : i32
    %126 = tpu.dynamic_rotate %119 by %c127_i32_70 dim 1 : vector<8x128xf32>, i32 -> vector<8x128xf32>
    %127 = arith.mulf %106, %123 : vector<8x128xf32>
    %128 = arith.mulf %127, %119 : vector<8x128xf32>
    %129 = arith.subf %121, %95 : vector<8x128xf32>
    %130 = arith.mulf %129, %125 : vector<8x128xf32>
    %131 = arith.mulf %130, %126 : vector<8x128xf32>
    %132 = arith.addf %128, %131 : vector<8x128xf32>
    %c25 = arith.constant 25 : index
    %c0_71 = arith.constant 0 : index
    %c0_72 = arith.constant 0 : index
    %133 = vector.load %arg1[%c25, %c0_71, %c0_72] : memref<68x8x128xf32, #tpu.memory_space<vmem>>, vector<1x8x128xf32>
    %134 = vector.shape_cast %133 : vector<1x8x128xf32> to vector<8x128xf32>
    %c26 = arith.constant 26 : index
    %c0_73 = arith.constant 0 : index
    %c0_74 = arith.constant 0 : index
    %135 = vector.load %arg1[%c26, %c0_73, %c0_74] : memref<68x8x128xf32, #tpu.memory_space<vmem>>, vector<1x8x128xf32>
    %136 = vector.shape_cast %135 : vector<1x8x128xf32> to vector<8x128xf32>
    %c27 = arith.constant 27 : index
    %c0_75 = arith.constant 0 : index
    %c0_76 = arith.constant 0 : index
    %137 = vector.load %arg1[%c27, %c0_75, %c0_76] : memref<68x8x128xf32, #tpu.memory_space<vmem>>, vector<1x8x128xf32>
    %138 = vector.shape_cast %137 : vector<1x8x128xf32> to vector<8x128xf32>
    %c127_i32_77 = arith.constant 127 : i32
    %139 = tpu.dynamic_rotate %132 by %c127_i32_77 dim 1 : vector<8x128xf32>, i32 -> vector<8x128xf32>
    %140 = arith.mulf %106, %136 : vector<8x128xf32>
    %141 = arith.mulf %140, %132 : vector<8x128xf32>
    %142 = arith.subf %134, %95 : vector<8x128xf32>
    %143 = arith.mulf %142, %138 : vector<8x128xf32>
    %144 = arith.mulf %143, %139 : vector<8x128xf32>
    %145 = arith.addf %141, %144 : vector<8x128xf32>
    %c33 = arith.constant 33 : index
    %c0_78 = arith.constant 0 : index
    %c0_79 = arith.constant 0 : index
    %146 = vector.load %arg1[%c33, %c0_78, %c0_79] : memref<68x8x128xf32, #tpu.memory_space<vmem>>, vector<1x8x128xf32>
    %147 = vector.shape_cast %146 : vector<1x8x128xf32> to vector<8x128xf32>
    %cst_80 = arith.constant 0.000000e+00 : f32
    %148 = vector.broadcast %cst_80 : f32 to vector<8x128xf32>
    %149 = arith.cmpf ogt, %147, %148 : vector<8x128xf32>
    %150 = arith.select %149, %95, %145 : vector<8x128xi1>, vector<8x128xf32>
    %c1_81 = arith.constant 1 : index
    %c0_82 = arith.constant 0 : index
    %c0_83 = arith.constant 0 : index
    %151 = vector.load %arg2[%c1_81, %c0_82, %c0_83] : memref<4x128x4xf32, #tpu.memory_space<vmem>>, vector<1x128x4xf32>
    %152 = vector.shape_cast %151 : vector<1x128x4xf32> to vector<128x4xf32>
    %cst_84 = arith.constant dense<0.000000e+00> : vector<8x4xf32>
    %153 = tpu.matmul %150, %152, %cst_84 {dimension_numbers = #tpu.dot_dimension_numbers<[1], [0], [0], [1], [0, 0, 1, 1], [], []>} : vector<8x128xf32>, vector<128x4xf32>, vector<8x4xf32> -> vector<8x4xf32>
    %c0_85 = arith.constant 0 : index
    %c4_86 = arith.constant 4 : index
    %154 = vector.load %arg3[%c0_85, %c4_86] : memref<8x128xf32, #tpu.memory_space<vmem>>, vector<8x4xf32>
    tpu.vector_store %arg3[%c0_85, %c4_86], %153 {strides = array<i32>} : memref<8x128xf32, #tpu.memory_space<vmem>>, vector<8x4xf32>,
    %155 = vector.extract_strided_slice %0 {offsets = [0, 2], sizes = [8, 1], strides = [1, 1]} : vector<8x3xf32> to vector<8x1xf32>
    %156 = vector.extract_strided_slice %153 {offsets = [0, 0], sizes = [8, 1], strides = [1, 1]} : vector<8x4xf32> to vector<8x1xf32>
    %157 = vector.extract_strided_slice %153 {offsets = [0, 1], sizes = [8, 1], strides = [1, 1]} : vector<8x4xf32> to vector<8x1xf32>
    %158 = vector.extract_strided_slice %153 {offsets = [0, 2], sizes = [8, 1], strides = [1, 1]} : vector<8x4xf32> to vector<8x1xf32>
    %159 = vector.extract_strided_slice %153 {offsets = [0, 3], sizes = [8, 1], strides = [1, 1]} : vector<8x4xf32> to vector<8x1xf32>
    %c45 = arith.constant 45 : index
    %c0_87 = arith.constant 0 : index
    %c0_88 = arith.constant 0 : index
    %160 = vector.load %arg1[%c45, %c0_87, %c0_88] : memref<68x8x128xf32, #tpu.memory_space<vmem>>, vector<1x8x128xf32>
    %161 = vector.shape_cast %160 : vector<1x8x128xf32> to vector<8x128xf32>
    %162 = vector.broadcast %155 : vector<8x1xf32> to vector<8x128xf32>
    %163 = arith.mulf %162, %161 : vector<8x128xf32>
    %c46 = arith.constant 46 : index
    %c0_89 = arith.constant 0 : index
    %c0_90 = arith.constant 0 : index
    %164 = vector.load %arg1[%c46, %c0_89, %c0_90] : memref<68x8x128xf32, #tpu.memory_space<vmem>>, vector<1x8x128xf32>
    %165 = vector.shape_cast %164 : vector<1x8x128xf32> to vector<8x128xf32>
    %166 = vector.broadcast %156 : vector<8x1xf32> to vector<8x128xf32>
    %167 = arith.mulf %166, %165 : vector<8x128xf32>
    %168 = arith.addf %163, %167 : vector<8x128xf32>
    %c47 = arith.constant 47 : index
    %c0_91 = arith.constant 0 : index
    %c0_92 = arith.constant 0 : index
    %169 = vector.load %arg1[%c47, %c0_91, %c0_92] : memref<68x8x128xf32, #tpu.memory_space<vmem>>, vector<1x8x128xf32>
    %170 = vector.shape_cast %169 : vector<1x8x128xf32> to vector<8x128xf32>
    %171 = vector.broadcast %157 : vector<8x1xf32> to vector<8x128xf32>
    %172 = arith.mulf %171, %170 : vector<8x128xf32>
    %173 = arith.addf %168, %172 : vector<8x128xf32>
    %c48 = arith.constant 48 : index
    %c0_93 = arith.constant 0 : index
    %c0_94 = arith.constant 0 : index
    %174 = vector.load %arg1[%c48, %c0_93, %c0_94] : memref<68x8x128xf32, #tpu.memory_space<vmem>>, vector<1x8x128xf32>
    %175 = vector.shape_cast %174 : vector<1x8x128xf32> to vector<8x128xf32>
    %176 = vector.broadcast %158 : vector<8x1xf32> to vector<8x128xf32>
    %177 = arith.mulf %176, %175 : vector<8x128xf32>
    %178 = arith.addf %173, %177 : vector<8x128xf32>
    %c49 = arith.constant 49 : index
    %c0_95 = arith.constant 0 : index
    %c0_96 = arith.constant 0 : index
    %179 = vector.load %arg1[%c49, %c0_95, %c0_96] : memref<68x8x128xf32, #tpu.memory_space<vmem>>, vector<1x8x128xf32>
    %180 = vector.shape_cast %179 : vector<1x8x128xf32> to vector<8x128xf32>
    %181 = vector.broadcast %159 : vector<8x1xf32> to vector<8x128xf32>
    %182 = arith.mulf %181, %180 : vector<8x128xf32>
    %183 = arith.addf %178, %182 : vector<8x128xf32>
    %c34 = arith.constant 34 : index
    %c0_97 = arith.constant 0 : index
    %c0_98 = arith.constant 0 : index
    %184 = vector.load %arg1[%c34, %c0_97, %c0_98] : memref<68x8x128xf32, #tpu.memory_space<vmem>>, vector<1x8x128xf32>
    %185 = vector.shape_cast %184 : vector<1x8x128xf32> to vector<8x128xf32>
    %c35 = arith.constant 35 : index
    %c0_99 = arith.constant 0 : index
    %c0_100 = arith.constant 0 : index
    %186 = vector.load %arg1[%c35, %c0_99, %c0_100] : memref<68x8x128xf32, #tpu.memory_space<vmem>>, vector<1x8x128xf32>
    %187 = vector.shape_cast %186 : vector<1x8x128xf32> to vector<8x128xf32>
    %188 = arith.cmpf oge, %183, %185 : vector<8x128xf32>
    %189 = arith.cmpf olt, %183, %187 : vector<8x128xf32>
    %190 = arith.andi %188, %189 : vector<8x128xi1>
    %cst_101 = arith.constant 1.000000e+00 : f32
    %cst_102 = arith.constant 0.000000e+00 : f32
    %191 = vector.broadcast %cst_101 : f32 to vector<8x128xf32>
    %192 = vector.broadcast %cst_102 : f32 to vector<8x128xf32>
    %193 = arith.select %190, %191, %192 : vector<8x128xi1>, vector<8x128xf32>
    %194 = arith.subf %183, %185 : vector<8x128xf32>
    %c36 = arith.constant 36 : index
    %c0_103 = arith.constant 0 : index
    %c0_104 = arith.constant 0 : index
    %195 = vector.load %arg1[%c36, %c0_103, %c0_104] : memref<68x8x128xf32, #tpu.memory_space<vmem>>, vector<1x8x128xf32>
    %196 = vector.shape_cast %195 : vector<1x8x128xf32> to vector<8x128xf32>
    %c37 = arith.constant 37 : index
    %c0_105 = arith.constant 0 : index
    %c0_106 = arith.constant 0 : index
    %197 = vector.load %arg1[%c37, %c0_105, %c0_106] : memref<68x8x128xf32, #tpu.memory_space<vmem>>, vector<1x8x128xf32>
    %198 = vector.shape_cast %197 : vector<1x8x128xf32> to vector<8x128xf32>
    %c38 = arith.constant 38 : index
    %c0_107 = arith.constant 0 : index
    %c0_108 = arith.constant 0 : index
    %199 = vector.load %arg1[%c38, %c0_107, %c0_108] : memref<68x8x128xf32, #tpu.memory_space<vmem>>, vector<1x8x128xf32>
    %200 = vector.shape_cast %199 : vector<1x8x128xf32> to vector<8x128xf32>
    %c127_i32_109 = arith.constant 127 : i32
    %201 = tpu.dynamic_rotate %193 by %c127_i32_109 dim 1 : vector<8x128xf32>, i32 -> vector<8x128xf32>
    %202 = arith.mulf %194, %198 : vector<8x128xf32>
    %203 = arith.mulf %202, %193 : vector<8x128xf32>
    %204 = arith.subf %196, %183 : vector<8x128xf32>
    %205 = arith.mulf %204, %200 : vector<8x128xf32>
    %206 = arith.mulf %205, %201 : vector<8x128xf32>
    %207 = arith.addf %203, %206 : vector<8x128xf32>
    %c39 = arith.constant 39 : index
    %c0_110 = arith.constant 0 : index
    %c0_111 = arith.constant 0 : index
    %208 = vector.load %arg1[%c39, %c0_110, %c0_111] : memref<68x8x128xf32, #tpu.memory_space<vmem>>, vector<1x8x128xf32>
    %209 = vector.shape_cast %208 : vector<1x8x128xf32> to vector<8x128xf32>
    %c40 = arith.constant 40 : index
    %c0_112 = arith.constant 0 : index
    %c0_113 = arith.constant 0 : index
    %210 = vector.load %arg1[%c40, %c0_112, %c0_113] : memref<68x8x128xf32, #tpu.memory_space<vmem>>, vector<1x8x128xf32>
    %211 = vector.shape_cast %210 : vector<1x8x128xf32> to vector<8x128xf32>
    %c41 = arith.constant 41 : index
    %c0_114 = arith.constant 0 : index
    %c0_115 = arith.constant 0 : index
    %212 = vector.load %arg1[%c41, %c0_114, %c0_115] : memref<68x8x128xf32, #tpu.memory_space<vmem>>, vector<1x8x128xf32>
    %213 = vector.shape_cast %212 : vector<1x8x128xf32> to vector<8x128xf32>
    %c127_i32_116 = arith.constant 127 : i32
    %214 = tpu.dynamic_rotate %207 by %c127_i32_116 dim 1 : vector<8x128xf32>, i32 -> vector<8x128xf32>
    %215 = arith.mulf %194, %211 : vector<8x128xf32>
    %216 = arith.mulf %215, %207 : vector<8x128xf32>
    %217 = arith.subf %209, %183 : vector<8x128xf32>
    %218 = arith.mulf %217, %213 : vector<8x128xf32>
    %219 = arith.mulf %218, %214 : vector<8x128xf32>
    %220 = arith.addf %216, %219 : vector<8x128xf32>
    %c42 = arith.constant 42 : index
    %c0_117 = arith.constant 0 : index
    %c0_118 = arith.constant 0 : index
    %221 = vector.load %arg1[%c42, %c0_117, %c0_118] : memref<68x8x128xf32, #tpu.memory_space<vmem>>, vector<1x8x128xf32>
    %222 = vector.shape_cast %221 : vector<1x8x128xf32> to vector<8x128xf32>
    %c43 = arith.constant 43 : index
    %c0_119 = arith.constant 0 : index
    %c0_120 = arith.constant 0 : index
    %223 = vector.load %arg1[%c43, %c0_119, %c0_120] : memref<68x8x128xf32, #tpu.memory_space<vmem>>, vector<1x8x128xf32>
    %224 = vector.shape_cast %223 : vector<1x8x128xf32> to vector<8x128xf32>
    %c44 = arith.constant 44 : index
    %c0_121 = arith.constant 0 : index
    %c0_122 = arith.constant 0 : index
    %225 = vector.load %arg1[%c44, %c0_121, %c0_122] : memref<68x8x128xf32, #tpu.memory_space<vmem>>, vector<1x8x128xf32>
    %226 = vector.shape_cast %225 : vector<1x8x128xf32> to vector<8x128xf32>
    %c127_i32_123 = arith.constant 127 : i32
    %227 = tpu.dynamic_rotate %220 by %c127_i32_123 dim 1 : vector<8x128xf32>, i32 -> vector<8x128xf32>
    %228 = arith.mulf %194, %224 : vector<8x128xf32>
    %229 = arith.mulf %228, %220 : vector<8x128xf32>
    %230 = arith.subf %222, %183 : vector<8x128xf32>
    %231 = arith.mulf %230, %226 : vector<8x128xf32>
    %232 = arith.mulf %231, %227 : vector<8x128xf32>
    %233 = arith.addf %229, %232 : vector<8x128xf32>
    %c50 = arith.constant 50 : index
    %c0_124 = arith.constant 0 : index
    %c0_125 = arith.constant 0 : index
    %234 = vector.load %arg1[%c50, %c0_124, %c0_125] : memref<68x8x128xf32, #tpu.memory_space<vmem>>, vector<1x8x128xf32>
    %235 = vector.shape_cast %234 : vector<1x8x128xf32> to vector<8x128xf32>
    %cst_126 = arith.constant 0.000000e+00 : f32
    %236 = vector.broadcast %cst_126 : f32 to vector<8x128xf32>
    %237 = arith.cmpf ogt, %235, %236 : vector<8x128xf32>
    %238 = arith.select %237, %183, %233 : vector<8x128xi1>, vector<8x128xf32>
    %c2_127 = arith.constant 2 : index
    %c0_128 = arith.constant 0 : index
    %c0_129 = arith.constant 0 : index
    %239 = vector.load %arg2[%c2_127, %c0_128, %c0_129] : memref<4x128x4xf32, #tpu.memory_space<vmem>>, vector<1x128x4xf32>
    %240 = vector.shape_cast %239 : vector<1x128x4xf32> to vector<128x4xf32>
    %cst_130 = arith.constant dense<0.000000e+00> : vector<8x4xf32>
    %241 = tpu.matmul %238, %240, %cst_130 {dimension_numbers = #tpu.dot_dimension_numbers<[1], [0], [0], [1], [0, 0, 1, 1], [], []>} : vector<8x128xf32>, vector<128x4xf32>, vector<8x4xf32> -> vector<8x4xf32>
    %c0_131 = arith.constant 0 : index
    %c8_132 = arith.constant 8 : index
    %242 = vector.load %arg3[%c0_131, %c8_132] : memref<8x128xf32, #tpu.memory_space<vmem>>, vector<8x4xf32>
    tpu.vector_store %arg3[%c0_131, %c8_132], %241 {strides = array<i32>} : memref<8x128xf32, #tpu.memory_space<vmem>>, vector<8x4xf32>,
    %243 = vector.extract_strided_slice %241 {offsets = [0, 0], sizes = [8, 1], strides = [1, 1]} : vector<8x4xf32> to vector<8x1xf32>
    %244 = vector.extract_strided_slice %241 {offsets = [0, 1], sizes = [8, 1], strides = [1, 1]} : vector<8x4xf32> to vector<8x1xf32>
    %245 = vector.extract_strided_slice %241 {offsets = [0, 2], sizes = [8, 1], strides = [1, 1]} : vector<8x4xf32> to vector<8x1xf32>
    %246 = vector.extract_strided_slice %241 {offsets = [0, 3], sizes = [8, 1], strides = [1, 1]} : vector<8x4xf32> to vector<8x1xf32>
    %c62 = arith.constant 62 : index
    %c0_133 = arith.constant 0 : index
    %c0_134 = arith.constant 0 : index
    %247 = vector.load %arg1[%c62, %c0_133, %c0_134] : memref<68x8x128xf32, #tpu.memory_space<vmem>>, vector<1x8x128xf32>
    %248 = vector.shape_cast %247 : vector<1x8x128xf32> to vector<8x128xf32>
    %249 = vector.broadcast %243 : vector<8x1xf32> to vector<8x128xf32>
    %250 = arith.mulf %249, %248 : vector<8x128xf32>
    %c63 = arith.constant 63 : index
    %c0_135 = arith.constant 0 : index
    %c0_136 = arith.constant 0 : index
    %251 = vector.load %arg1[%c63, %c0_135, %c0_136] : memref<68x8x128xf32, #tpu.memory_space<vmem>>, vector<1x8x128xf32>
    %252 = vector.shape_cast %251 : vector<1x8x128xf32> to vector<8x128xf32>
    %253 = vector.broadcast %244 : vector<8x1xf32> to vector<8x128xf32>
    %254 = arith.mulf %253, %252 : vector<8x128xf32>
    %255 = arith.addf %250, %254 : vector<8x128xf32>
    %c64 = arith.constant 64 : index
    %c0_137 = arith.constant 0 : index
    %c0_138 = arith.constant 0 : index
    %256 = vector.load %arg1[%c64, %c0_137, %c0_138] : memref<68x8x128xf32, #tpu.memory_space<vmem>>, vector<1x8x128xf32>
    %257 = vector.shape_cast %256 : vector<1x8x128xf32> to vector<8x128xf32>
    %258 = vector.broadcast %245 : vector<8x1xf32> to vector<8x128xf32>
    %259 = arith.mulf %258, %257 : vector<8x128xf32>
    %260 = arith.addf %255, %259 : vector<8x128xf32>
    %c65 = arith.constant 65 : index
    %c0_139 = arith.constant 0 : index
    %c0_140 = arith.constant 0 : index
    %261 = vector.load %arg1[%c65, %c0_139, %c0_140] : memref<68x8x128xf32, #tpu.memory_space<vmem>>, vector<1x8x128xf32>
    %262 = vector.shape_cast %261 : vector<1x8x128xf32> to vector<8x128xf32>
    %263 = vector.broadcast %246 : vector<8x1xf32> to vector<8x128xf32>
    %264 = arith.mulf %263, %262 : vector<8x128xf32>
    %265 = arith.addf %260, %264 : vector<8x128xf32>
    %c51 = arith.constant 51 : index
    %c0_141 = arith.constant 0 : index
    %c0_142 = arith.constant 0 : index
    %266 = vector.load %arg1[%c51, %c0_141, %c0_142] : memref<68x8x128xf32, #tpu.memory_space<vmem>>, vector<1x8x128xf32>
    %267 = vector.shape_cast %266 : vector<1x8x128xf32> to vector<8x128xf32>
    %c52 = arith.constant 52 : index
    %c0_143 = arith.constant 0 : index
    %c0_144 = arith.constant 0 : index
    %268 = vector.load %arg1[%c52, %c0_143, %c0_144] : memref<68x8x128xf32, #tpu.memory_space<vmem>>, vector<1x8x128xf32>
    %269 = vector.shape_cast %268 : vector<1x8x128xf32> to vector<8x128xf32>
    %270 = arith.cmpf oge, %265, %267 : vector<8x128xf32>
    %271 = arith.cmpf olt, %265, %269 : vector<8x128xf32>
    %272 = arith.andi %270, %271 : vector<8x128xi1>
    %cst_145 = arith.constant 1.000000e+00 : f32
    %cst_146 = arith.constant 0.000000e+00 : f32
    %273 = vector.broadcast %cst_145 : f32 to vector<8x128xf32>
    %274 = vector.broadcast %cst_146 : f32 to vector<8x128xf32>
    %275 = arith.select %272, %273, %274 : vector<8x128xi1>, vector<8x128xf32>
    %276 = arith.subf %265, %267 : vector<8x128xf32>
    %c53 = arith.constant 53 : index
    %c0_147 = arith.constant 0 : index
    %c0_148 = arith.constant 0 : index
    %277 = vector.load %arg1[%c53, %c0_147, %c0_148] : memref<68x8x128xf32, #tpu.memory_space<vmem>>, vector<1x8x128xf32>
    %278 = vector.shape_cast %277 : vector<1x8x128xf32> to vector<8x128xf32>
    %c54 = arith.constant 54 : index
    %c0_149 = arith.constant 0 : index
    %c0_150 = arith.constant 0 : index
    %279 = vector.load %arg1[%c54, %c0_149, %c0_150] : memref<68x8x128xf32, #tpu.memory_space<vmem>>, vector<1x8x128xf32>
    %280 = vector.shape_cast %279 : vector<1x8x128xf32> to vector<8x128xf32>
    %c55 = arith.constant 55 : index
    %c0_151 = arith.constant 0 : index
    %c0_152 = arith.constant 0 : index
    %281 = vector.load %arg1[%c55, %c0_151, %c0_152] : memref<68x8x128xf32, #tpu.memory_space<vmem>>, vector<1x8x128xf32>
    %282 = vector.shape_cast %281 : vector<1x8x128xf32> to vector<8x128xf32>
    %c127_i32_153 = arith.constant 127 : i32
    %283 = tpu.dynamic_rotate %275 by %c127_i32_153 dim 1 : vector<8x128xf32>, i32 -> vector<8x128xf32>
    %284 = arith.mulf %276, %280 : vector<8x128xf32>
    %285 = arith.mulf %284, %275 : vector<8x128xf32>
    %286 = arith.subf %278, %265 : vector<8x128xf32>
    %287 = arith.mulf %286, %282 : vector<8x128xf32>
    %288 = arith.mulf %287, %283 : vector<8x128xf32>
    %289 = arith.addf %285, %288 : vector<8x128xf32>
    %c56 = arith.constant 56 : index
    %c0_154 = arith.constant 0 : index
    %c0_155 = arith.constant 0 : index
    %290 = vector.load %arg1[%c56, %c0_154, %c0_155] : memref<68x8x128xf32, #tpu.memory_space<vmem>>, vector<1x8x128xf32>
    %291 = vector.shape_cast %290 : vector<1x8x128xf32> to vector<8x128xf32>
    %c57 = arith.constant 57 : index
    %c0_156 = arith.constant 0 : index
    %c0_157 = arith.constant 0 : index
    %292 = vector.load %arg1[%c57, %c0_156, %c0_157] : memref<68x8x128xf32, #tpu.memory_space<vmem>>, vector<1x8x128xf32>
    %293 = vector.shape_cast %292 : vector<1x8x128xf32> to vector<8x128xf32>
    %c58 = arith.constant 58 : index
    %c0_158 = arith.constant 0 : index
    %c0_159 = arith.constant 0 : index
    %294 = vector.load %arg1[%c58, %c0_158, %c0_159] : memref<68x8x128xf32, #tpu.memory_space<vmem>>, vector<1x8x128xf32>
    %295 = vector.shape_cast %294 : vector<1x8x128xf32> to vector<8x128xf32>
    %c127_i32_160 = arith.constant 127 : i32
    %296 = tpu.dynamic_rotate %289 by %c127_i32_160 dim 1 : vector<8x128xf32>, i32 -> vector<8x128xf32>
    %297 = arith.mulf %276, %293 : vector<8x128xf32>
    %298 = arith.mulf %297, %289 : vector<8x128xf32>
    %299 = arith.subf %291, %265 : vector<8x128xf32>
    %300 = arith.mulf %299, %295 : vector<8x128xf32>
    %301 = arith.mulf %300, %296 : vector<8x128xf32>
    %302 = arith.addf %298, %301 : vector<8x128xf32>
    %c59 = arith.constant 59 : index
    %c0_161 = arith.constant 0 : index
    %c0_162 = arith.constant 0 : index
    %303 = vector.load %arg1[%c59, %c0_161, %c0_162] : memref<68x8x128xf32, #tpu.memory_space<vmem>>, vector<1x8x128xf32>
    %304 = vector.shape_cast %303 : vector<1x8x128xf32> to vector<8x128xf32>
    %c60 = arith.constant 60 : index
    %c0_163 = arith.constant 0 : index
    %c0_164 = arith.constant 0 : index
    %305 = vector.load %arg1[%c60, %c0_163, %c0_164] : memref<68x8x128xf32, #tpu.memory_space<vmem>>, vector<1x8x128xf32>
    %306 = vector.shape_cast %305 : vector<1x8x128xf32> to vector<8x128xf32>
    %c61 = arith.constant 61 : index
    %c0_165 = arith.constant 0 : index
    %c0_166 = arith.constant 0 : index
    %307 = vector.load %arg1[%c61, %c0_165, %c0_166] : memref<68x8x128xf32, #tpu.memory_space<vmem>>, vector<1x8x128xf32>
    %308 = vector.shape_cast %307 : vector<1x8x128xf32> to vector<8x128xf32>
    %c127_i32_167 = arith.constant 127 : i32
    %309 = tpu.dynamic_rotate %302 by %c127_i32_167 dim 1 : vector<8x128xf32>, i32 -> vector<8x128xf32>
    %310 = arith.mulf %276, %306 : vector<8x128xf32>
    %311 = arith.mulf %310, %302 : vector<8x128xf32>
    %312 = arith.subf %304, %265 : vector<8x128xf32>
    %313 = arith.mulf %312, %308 : vector<8x128xf32>
    %314 = arith.mulf %313, %309 : vector<8x128xf32>
    %315 = arith.addf %311, %314 : vector<8x128xf32>
    %c67 = arith.constant 67 : index
    %c0_168 = arith.constant 0 : index
    %c0_169 = arith.constant 0 : index
    %316 = vector.load %arg1[%c67, %c0_168, %c0_169] : memref<68x8x128xf32, #tpu.memory_space<vmem>>, vector<1x8x128xf32>
    %317 = vector.shape_cast %316 : vector<1x8x128xf32> to vector<8x128xf32>
    %cst_170 = arith.constant 0.000000e+00 : f32
    %318 = vector.broadcast %cst_170 : f32 to vector<8x128xf32>
    %319 = arith.cmpf ogt, %317, %318 : vector<8x128xf32>
    %320 = arith.select %319, %265, %315 : vector<8x128xi1>, vector<8x128xf32>
    %c3_171 = arith.constant 3 : index
    %c0_172 = arith.constant 0 : index
    %c0_173 = arith.constant 0 : index
    %321 = vector.load %arg2[%c3_171, %c0_172, %c0_173] : memref<4x128x4xf32, #tpu.memory_space<vmem>>, vector<1x128x4xf32>
    %322 = vector.shape_cast %321 : vector<1x128x4xf32> to vector<128x4xf32>
    %cst_174 = arith.constant dense<0.000000e+00> : vector<8x4xf32>
    %323 = tpu.matmul %320, %322, %cst_174 {dimension_numbers = #tpu.dot_dimension_numbers<[1], [0], [0], [1], [0, 0, 1, 1], [], []>} : vector<8x128xf32>, vector<128x4xf32>, vector<8x4xf32> -> vector<8x4xf32>
    %324 = vector.extract_strided_slice %323 {offsets = [0, 0], sizes = [8, 2], strides = [1, 1]} : vector<8x4xf32> to vector<8x2xf32>
    %c0_175 = arith.constant 0 : index
    %c12 = arith.constant 12 : index
    %325 = vector.load %arg3[%c0_175, %c12] : memref<8x128xf32, #tpu.memory_space<vmem>>, vector<8x2xf32>
    tpu.vector_store %arg3[%c0_175, %c12], %324 {strides = array<i32>} : memref<8x128xf32, #tpu.memory_space<vmem>>, vector<8x2xf32>,
    return
  }
}

</mosaic_0001>

<llo_original>
// kernel: tpu_custom_call.1
$region0: #{tpu_custom_call.1}
  #allocation0 [shape = 'u32[]', space=smem, size = 0x4, offset = 0x4, fixed_abs, tag = 'smem constant byte address 0x4 - core index']
  #allocation1 [shape = 'u32[144,128]{1,0:T(1,128)}', space=vmem, size = 0x12000, scoped, tag = 'internal scratch']
  %s0 = inlined_call_operand.vmem [shape: f32[8,3], index: 0, kind: input, shape index: {}]
  %s1 = inlined_call_operand.hbm [shape: f32[68,8,128], index: 1, kind: input, shape index: {}]
  %s2 = inlined_call_operand.vmem [shape: f32[4,128,4], index: 2, kind: input, shape index: {}]
  %s3 = inlined_call_operand.hbm [shape: f32[8,128], index: 3, kind: output, shape index: {}]
  %s4 = sld [smem:[#allocation0]]
  $region26: #{tpu_custom_call.1} parent=0
    _
  %s6 = ssub.s32 1, %s4
  %s7 = scalar_select 0, %s6, %s4
  $region1: #{tpu_custom_call.1} parent=0
    #allocation2 [shape = 'u8[278528]{0}', space=vmem, size = 0x44000, scoped, tag = 'input window, operand 1, single buffered']
    #allocation3 [shape = 's32[1]{0}', space=sflag, size = 0x4, scoped, tag = 'scoped memory for tpu_custom_call.1']
    #allocation4 [shape = 's32[1]{0}', space=sflag, size = 0x4, scoped, tag = 'scoped memory for tpu_custom_call.1']
    #allocation5 [shape = 'u8[4096]{0}', space=vmem, size = 0x1000, scoped, tag = 'output window, operand 0, single buffered']
    %8 = vsyncpa [#allocation3], 0
    %9 = vsyncpa [#allocation4], 0
    // Predicated region
    $region2: #{tpu_custom_call.1} parent=1 // pred_check
      _
    $region3: #{tpu_custom_call.1} parent=1 // pred_check_branch
      %11 = sbr.rel (0) target = $region5
    $region4: #{tpu_custom_call.1} parent=1 // pred_region
      _
    $region5: #{tpu_custom_call.1} parent=1 // pred_fallthru
      _
    // Predicated region
    $region6: #{tpu_custom_call.1} parent=1 // pred_check
      _
    $region7: #{tpu_custom_call.1} parent=1 // pred_check_branch
      %13 = sbr.rel (0) target = $region9
    $region8: #{tpu_custom_call.1} parent=1 // pred_region
      %s15 = ssub.s32 8704, 8704
      %16 = vsyncadd [#allocation3], %s15
      %s17 = sshll.u32 [#allocation2], 4
      %s18 = int_to_ptr.vmem [resolvable:$true] %s17
      %23 = dma.hbm_to_vmem [thread:$0]  %s1, 8704, %s18, [#allocation3], 128, 128, 8
    $region9: #{tpu_custom_call.1} parent=1 // pred_fallthru
      _
    // Predicated region
    $region10: #{tpu_custom_call.1} parent=1 // pred_check
      _
    $region11: #{tpu_custom_call.1} parent=1 // pred_check_branch
      %25 = sbr.rel (0) target = $region13
    $region12: #{tpu_custom_call.1} parent=1 // pred_region
      _
    $region13: #{tpu_custom_call.1} parent=1 // pred_fallthru
      _
    // Predicated region
    $region14: #{tpu_custom_call.1} parent=1 // pred_check
      _
    $region15: #{tpu_custom_call.1} parent=1 // pred_check_branch
      %27 = sbr.rel (0) target = $region17
    $region16: #{tpu_custom_call.1} parent=1 // pred_region
      %28 = dma.done [#allocation3], 8704
    $region17: #{tpu_custom_call.1} parent=1 // pred_fallthru
      _
    %v29 = vld [vmem:[%s0] sm:$0xff]
    %30 = vst [vmem:[#allocation5] sm:$0xff] 0.0
    %s31 = scalar_lea.vmem [#allocation2], 88
    %v32 = vld [vmem:[%s31] sm:$0xff]
    %34 = vset.pattern.permute.xlu0 0
    %35 = vperm.xlu0 %34, %v29
    %v36 = vpop.permute.xlu0 %35
    %v38 = vmul.f32 %v36, %v32
    %v39 = vld [vmem:[#allocation2] sm:$0xff]
    %s40 = scalar_lea.vmem [#allocation2], 8
    %v41 = vld [vmem:[%s40] sm:$0xff]
    %vm42 = vcmp.ge.f32.partialorder %v38, %v39
    %vm43 = vcmp.lt.f32.partialorder %v38, %v41
    %vm44 = vmand %vm42, %vm43
    %v45 = vsel %vm44, 1.0, 0.0
    %v46 = vsub.f32 %v38, %v39
    %s47 = scalar_lea.vmem [#allocation2], 16
    %v48 = vld [vmem:[%s47] sm:$0xff]
    %s49 = scalar_lea.vmem [#allocation2], 24
    %v50 = vld [vmem:[%s49] sm:$0xff]
    %s51 = scalar_lea.vmem [#allocation2], 32
    %v52 = vld [vmem:[%s51] sm:$0xff]
    %53 = vrot.lane.b32.xlu0 %v45, 127
    %v54 = vpop.permute.xlu0 %53
    %v55 = vmul.f32 %v46, %v50
    %v56 = vmul.f32 %v55, %v45
    %v57 = vsub.f32 %v48, %v38
    %v58 = vmul.f32 %v57, %v52
    %v59 = vmul.f32 %v58, %v54
    %v60 = vadd.f32 %v56, %v59
    %s61 = scalar_lea.vmem [#allocation2], 40
    %v62 = vld [vmem:[%s61] sm:$0xff]
    %s63 = scalar_lea.vmem [#allocation2], 48
    %v64 = vld [vmem:[%s63] sm:$0xff]
    %s65 = scalar_lea.vmem [#allocation2], 56
    %v66 = vld [vmem:[%s65] sm:$0xff]
    %67 = vrot.lane.b32.xlu0 %v60, 127
    %v68 = vpop.permute.xlu0 %67
    %v69 = vmul.f32 %v46, %v64
    %v70 = vmul.f32 %v69, %v60
    %v71 = vsub.f32 %v62, %v38
    %v72 = vmul.f32 %v71, %v66
    %v73 = vmul.f32 %v72, %v68
    %v74 = vadd.f32 %v70, %v73
    %s75 = scalar_lea.vmem [#allocation2], 64
    %v76 = vld [vmem:[%s75] sm:$0xff]
    %s77 = scalar_lea.vmem [#allocation2], 72
    %v78 = vld [vmem:[%s77] sm:$0xff]
    %s79 = scalar_lea.vmem [#allocation2], 80
    %v80 = vld [vmem:[%s79] sm:$0xff]
    %81 = vrot.lane.b32.xlu0 %v74, 127
    %v82 = vpop.permute.xlu0 %81
    %v83 = vmul.f32 %v46, %v78
    %v84 = vmul.f32 %v83, %v74
    %v85 = vsub.f32 %v76, %v38
    %v86 = vmul.f32 %v85, %v80
    %v87 = vmul.f32 %v86, %v82
    %v88 = vadd.f32 %v84, %v87
    %s89 = scalar_lea.vmem [#allocation2], 128
    %v90 = vld [vmem:[%s89] sm:$0xff]
    %vm91 = vcmp.gt.f32.partialorder %v90, 0.0
    %v92 = vsel %vm91, %v38, %v88
    %v93 = vld [vmem:[%s2] sm:$0xff]
    %v94 = vld [vmem:[%s2 + $0x8] sm:$0xff]
    %v95 = vld [vmem:[%s2 + $0x10] sm:$0xff]
    %v96 = vld [vmem:[%s2 + $0x18] sm:$0xff]
    %v97 = vld [vmem:[%s2 + $0x20] sm:$0xff]
    %v98 = vld [vmem:[%s2 + $0x28] sm:$0xff]
    %v99 = vld [vmem:[%s2 + $0x30] sm:$0xff]
    %v100 = vld [vmem:[%s2 + $0x38] sm:$0xff]
    %v101 = vld [vmem:[%s2 + $0x40] sm:$0xff]
    %v102 = vld [vmem:[%s2 + $0x48] sm:$0xff]
    %v103 = vld [vmem:[%s2 + $0x50] sm:$0xff]
    %v104 = vld [vmem:[%s2 + $0x58] sm:$0xff]
    %v105 = vld [vmem:[%s2 + $0x60] sm:$0xff]
    %v106 = vld [vmem:[%s2 + $0x68] sm:$0xff]
    %v107 = vld [vmem:[%s2 + $0x70] sm:$0xff]
    %v108 = vld [vmem:[%s2 + $0x78] sm:$0xff]
    %109 = vmatprep.subr.mxu0 0.0
    %110 = vmatpush1.msra.mxu0 %v93
    %111 = vmatprep.subr.mxu0 0.0
    %112 = vmatpush1.msra.mxu0 %v94
    %113 = vmatprep.subr.mxu0 0.0
    %114 = vmatpush1.msra.mxu0 %v95
    %115 = vmatprep.subr.mxu0 0.0
    %116 = vmatpush1.msra.mxu0 %v96
    %117 = vmatprep.subr.mxu0 0.0
    %118 = vmatpush1.msra.mxu0 %v97
    %119 = vmatprep.subr.mxu0 0.0
    %120 = vmatpush1.msra.mxu0 %v98
    %121 = vmatprep.subr.mxu0 0.0
    %122 = vmatpush1.msra.mxu0 %v99
    %123 = vmatprep.subr.mxu0 0.0
    %124 = vmatpush1.msra.mxu0 %v100
    %125 = vmatprep.subr.mxu0 0.0
    %126 = vmatpush1.msra.mxu0 %v101
    %127 = vmatprep.subr.mxu0 0.0
    %128 = vmatpush1.msra.mxu0 %v102
    %129 = vmatprep.subr.mxu0 0.0
    %130 = vmatpush1.msra.mxu0 %v103
    %131 = vmatprep.subr.mxu0 0.0
    %132 = vmatpush1.msra.mxu0 %v104
    %133 = vmatprep.subr.mxu0 0.0
    %134 = vmatpush1.msra.mxu0 %v105
    %135 = vmatprep.subr.mxu0 0.0
    %136 = vmatpush1.msra.mxu0 %v106
    %137 = vmatprep.subr.mxu0 0.0
    %138 = vmatpush1.msra.mxu0 %v107
    %139 = vmatprep.subr.mxu0 0.0
    %140 = vmatpush1.msra.mxu0 %v108
    %141 = vmatprep.subr.mxu0 0.0
    %142 = vmatpush1.msra.mxu0 0.0
    %143 = vmatprep.subr.mxu0 0.0
    %144 = vmatpush1.msra.mxu0 0.0
    %145 = vmatprep.subr.mxu0 0.0
    %146 = vmatpush1.msra.mxu0 0.0
    %147 = vmatprep.subr.mxu0 0.0
    %148 = vmatpush1.msra.mxu0 0.0
    %149 = vmatprep.subr.mxu0 0.0
    %150 = vmatpush1.msra.mxu0 0.0
    %151 = vmatprep.subr.mxu0 0.0
    %152 = vmatpush1.msra.mxu0 0.0
    %153 = vmatprep.subr.mxu0 0.0
    %154 = vmatpush1.msra.mxu0 0.0
    %155 = vmatprep.subr.mxu0 0.0
    %156 = vmatpush1.msra.mxu0 0.0
    %157 = vmatprep.subr.mxu0 0.0
    %158 = vmatpush1.msra.mxu0 0.0
    %159 = vmatprep.subr.mxu0 0.0
    %160 = vmatpush1.msra.mxu0 0.0
    %161 = vmatprep.subr.mxu0 0.0
    %162 = vmatpush1.msra.mxu0 0.0
    %163 = vmatprep.subr.mxu0 0.0
    %164 = vmatpush1.msra.mxu0 0.0
    %165 = vmatprep.subr.mxu0 0.0
    %166 = vmatpush1.msra.mxu0 0.0
    %167 = vmatprep.subr.mxu0 0.0
    %168 = vmatpush1.msra.mxu0 0.0
    %169 = vmatprep.subr.mxu0 0.0
    %170 = vmatpush1.msra.mxu0 0.0
    %171 = vmatprep.subr.mxu0 0.0
    %172 = vmatpush1.msra.mxu0 0.0
    %173 = vmatprep.mubr.f32.mxu0 0.0
    %174 = vmatmul.mubr.f32.gmra.mrb[0].mxu0 %v92
    %v175 = vpop.f32.mrb[0].mxu0
    %v176 = vadd.f32 0.0, %v175
    %v177 = vpop.f32.mrb[0].mxu0
    %178 = vdwg.mxu0
    %vm179 = vcmask 31744
    %180 = vst.msk [vmem:[#allocation5] sm:$0xff] %vm179, %v176
    %s181 = scalar_lea.vmem [#allocation2], 224
    %v182 = vld [vmem:[%s181] sm:$0xff]
    %183 = vset.pattern.permute.xlu0 1
    %184 = vperm.xlu0 %183, %v29
    %v185 = vpop.permute.xlu0 %184
    %v187 = vmul.f32 %v185, %v182
    %s188 = scalar_lea.vmem [#allocation2], 232
    %v189 = vld [vmem:[%s188] sm:$0xff]
    %191 = vset.pattern.permute.xlu0 0
    %192 = vperm.xlu0 %191, %v176
    %v193 = vpop.permute.xlu0 %192
    %v195 = vmul.f32 %v193, %v189
    %v196 = vadd.f32 %v187, %v195
    %s197 = scalar_lea.vmem [#allocation2], 240
    %v198 = vld [vmem:[%s197] sm:$0xff]
    %199 = vset.pattern.permute.xlu0 1
    %200 = vperm.xlu0 %199, %v176
    %v201 = vpop.permute.xlu0 %200
    %v203 = vmul.f32 %v201, %v198
    %v204 = vadd.f32 %v196, %v203
    %s205 = scalar_lea.vmem [#allocation2], 248
    %v206 = vld [vmem:[%s205] sm:$0xff]
    %207 = vset.pattern.permute.xlu0 2
    %208 = vperm.xlu0 %207, %v176
    %v209 = vpop.permute.xlu0 %208
    %v211 = vmul.f32 %v209, %v206
    %v212 = vadd.f32 %v204, %v211
    %s213 = scalar_lea.vmem [#allocation2], 256
    %v214 = vld [vmem:[%s213] sm:$0xff]
    %215 = vset.pattern.permute.xlu0 3
    %216 = vperm.xlu0 %215, %v176
    %v217 = vpop.permute.xlu0 %216
    %v219 = vmul.f32 %v217, %v214
    %v220 = vadd.f32 %v212, %v219
    %s221 = scalar_lea.vmem [#allocation2], 136
    %v222 = vld [vmem:[%s221] sm:$0xff]
    %s223 = scalar_lea.vmem [#allocation2], 144
    %v224 = vld [vmem:[%s223] sm:$0xff]
    %vm225 = vcmp.ge.f32.partialorder %v220, %v222
    %vm226 = vcmp.lt.f32.partialorder %v220, %v224
    %vm227 = vmand %vm225, %vm226
    %v228 = vsel %vm227, 1.0, 0.0
    %v229 = vsub.f32 %v220, %v222
    %s230 = scalar_lea.vmem [#allocation2], 152
    %v231 = vld [vmem:[%s230] sm:$0xff]
    %s232 = scalar_lea.vmem [#allocation2], 160
    %v233 = vld [vmem:[%s232] sm:$0xff]
    %s234 = scalar_lea.vmem [#allocation2], 168
    %v235 = vld [vmem:[%s234] sm:$0xff]
    %236 = vrot.lane.b32.xlu0 %v228, 127
    %v237 = vpop.permute.xlu0 %236
    %v238 = vmul.f32 %v229, %v233
    %v239 = vmul.f32 %v238, %v228
    %v240 = vsub.f32 %v231, %v220
    %v241 = vmul.f32 %v240, %v235
    %v242 = vmul.f32 %v241, %v237
    %v243 = vadd.f32 %v239, %v242
    %s244 = scalar_lea.vmem [#allocation2], 176
    %v245 = vld [vmem:[%s244] sm:$0xff]
    %s246 = scalar_lea.vmem [#allocation2], 184
    %v247 = vld [vmem:[%s246] sm:$0xff]
    %s248 = scalar_lea.vmem [#allocation2], 192
    %v249 = vld [vmem:[%s248] sm:$0xff]
    %250 = vrot.lane.b32.xlu0 %v243, 127
    %v251 = vpop.permute.xlu0 %250
    %v252 = vmul.f32 %v229, %v247
    %v253 = vmul.f32 %v252, %v243
    %v254 = vsub.f32 %v245, %v220
    %v255 = vmul.f32 %v254, %v249
    %v256 = vmul.f32 %v255, %v251
    %v257 = vadd.f32 %v253, %v256
    %s258 = scalar_lea.vmem [#allocation2], 200
    %v259 = vld [vmem:[%s258] sm:$0xff]
    %s260 = scalar_lea.vmem [#allocation2], 208
    %v261 = vld [vmem:[%s260] sm:$0xff]
    %s262 = scalar_lea.vmem [#allocation2], 216
    %v263 = vld [vmem:[%s262] sm:$0xff]
    %264 = vrot.lane.b32.xlu0 %v257, 127
    %v265 = vpop.permute.xlu0 %264
    %v266 = vmul.f32 %v229, %v261
    %v267 = vmul.f32 %v266, %v257
    %v268 = vsub.f32 %v259, %v220
    %v269 = vmul.f32 %v268, %v263
    %v270 = vmul.f32 %v269, %v265
    %v271 = vadd.f32 %v267, %v270
    %s272 = scalar_lea.vmem [#allocation2], 264
    %v273 = vld [vmem:[%s272] sm:$0xff]
    %vm274 = vcmp.gt.f32.partialorder %v273, 0.0
    %v275 = vsel %vm274, %v220, %v271
    %s276 = scalar_lea.vmem %s2, 128
    %v277 = vld [vmem:[%s276] sm:$0xff]
    %v278 = vld [vmem:[%s276 + $0x8] sm:$0xff]
    %v279 = vld [vmem:[%s276 + $0x10] sm:$0xff]
    %v280 = vld [vmem:[%s276 + $0x18] sm:$0xff]
    %v281 = vld [vmem:[%s276 + $0x20] sm:$0xff]
    %v282 = vld [vmem:[%s276 + $0x28] sm:$0xff]
    %v283 = vld [vmem:[%s276 + $0x30] sm:$0xff]
    %v284 = vld [vmem:[%s276 + $0x38] sm:$0xff]
    %v285 = vld [vmem:[%s276 + $0x40] sm:$0xff]
    %v286 = vld [vmem:[%s276 + $0x48] sm:$0xff]
    %v287 = vld [vmem:[%s276 + $0x50] sm:$0xff]
    %v288 = vld [vmem:[%s276 + $0x58] sm:$0xff]
    %v289 = vld [vmem:[%s276 + $0x60] sm:$0xff]
    %v290 = vld [vmem:[%s276 + $0x68] sm:$0xff]
    %v291 = vld [vmem:[%s276 + $0x70] sm:$0xff]
    %v292 = vld [vmem:[%s276 + $0x78] sm:$0xff]
    %293 = vmatprep.subr.mxu0 0.0
    %294 = vmatpush1.msra.mxu0 %v277
    %295 = vmatprep.subr.mxu0 0.0
    %296 = vmatpush1.msra.mxu0 %v278
    %297 = vmatprep.subr.mxu0 0.0
    %298 = vmatpush1.msra.mxu0 %v279
    %299 = vmatprep.subr.mxu0 0.0
    %300 = vmatpush1.msra.mxu0 %v280
    %301 = vmatprep.subr.mxu0 0.0
    %302 = vmatpush1.msra.mxu0 %v281
    %303 = vmatprep.subr.mxu0 0.0
    %304 = vmatpush1.msra.mxu0 %v282
    %305 = vmatprep.subr.mxu0 0.0
    %306 = vmatpush1.msra.mxu0 %v283
    %307 = vmatprep.subr.mxu0 0.0
    %308 = vmatpush1.msra.mxu0 %v284
    %309 = vmatprep.subr.mxu0 0.0
    %310 = vmatpush1.msra.mxu0 %v285
    %311 = vmatprep.subr.mxu0 0.0
    %312 = vmatpush1.msra.mxu0 %v286
    %313 = vmatprep.subr.mxu0 0.0
    %314 = vmatpush1.msra.mxu0 %v287
    %315 = vmatprep.subr.mxu0 0.0
    %316 = vmatpush1.msra.mxu0 %v288
    %317 = vmatprep.subr.mxu0 0.0
    %318 = vmatpush1.msra.mxu0 %v289
    %319 = vmatprep.subr.mxu0 0.0
    %320 = vmatpush1.msra.mxu0 %v290
    %321 = vmatprep.subr.mxu0 0.0
    %322 = vmatpush1.msra.mxu0 %v291
    %323 = vmatprep.subr.mxu0 0.0
    %324 = vmatpush1.msra.mxu0 %v292
    %325 = vmatprep.subr.mxu0 0.0
    %326 = vmatpush1.msra.mxu0 0.0
    %327 = vmatprep.subr.mxu0 0.0
    %328 = vmatpush1.msra.mxu0 0.0
    %329 = vmatprep.subr.mxu0 0.0
    %330 = vmatpush1.msra.mxu0 0.0
    %331 = vmatprep.subr.mxu0 0.0
    %332 = vmatpush1.msra.mxu0 0.0
    %333 = vmatprep.subr.mxu0 0.0
    %334 = vmatpush1.msra.mxu0 0.0
    %335 = vmatprep.subr.mxu0 0.0
    %336 = vmatpush1.msra.mxu0 0.0
    %337 = vmatprep.subr.mxu0 0.0
    %338 = vmatpush1.msra.mxu0 0.0
    %339 = vmatprep.subr.mxu0 0.0
    %340 = vmatpush1.msra.mxu0 0.0
    %341 = vmatprep.subr.mxu0 0.0
    %342 = vmatpush1.msra.mxu0 0.0
    %343 = vmatprep.subr.mxu0 0.0
    %344 = vmatpush1.msra.mxu0 0.0
    %345 = vmatprep.subr.mxu0 0.0
    %346 = vmatpush1.msra.mxu0 0.0
    %347 = vmatprep.subr.mxu0 0.0
    %348 = vmatpush1.msra.mxu0 0.0
    %349 = vmatprep.subr.mxu0 0.0
    %350 = vmatpush1.msra.mxu0 0.0
    %351 = vmatprep.subr.mxu0 0.0
    %352 = vmatpush1.msra.mxu0 0.0
    %353 = vmatprep.subr.mxu0 0.0
    %354 = vmatpush1.msra.mxu0 0.0
    %355 = vmatprep.subr.mxu0 0.0
    %356 = vmatpush1.msra.mxu0 0.0
    %357 = vmatprep.mubr.f32.mxu0 0.0
    %358 = vmatmul.mubr.f32.gmra.mrb[0].mxu0 %v275
    %v359 = vpop.f32.mrb[0].mxu0
    %v360 = vadd.f32 0.0, %v359
    %v361 = vpop.f32.mrb[0].mxu0
    %362 = vdwg.mxu0
    %364 = vrot.lane.b32.xlu0 %v360, 4
    %v365 = vpop.permute.xlu0 %364
    %vm367 = vcmask 64544
    %368 = vst.msk [vmem:[#allocation5] sm:$0xff] %vm367, %v365
    %s369 = scalar_lea.vmem [#allocation2], 360
    %v370 = vld [vmem:[%s369] sm:$0xff]
    %371 = vset.pattern.permute.xlu0 2
    %372 = vperm.xlu0 %371, %v29
    %v373 = vpop.permute.xlu0 %372
    %v375 = vmul.f32 %v373, %v370
    %s376 = scalar_lea.vmem [#allocation2], 368
    %v377 = vld [vmem:[%s376] sm:$0xff]
    %378 = vset.pattern.permute.xlu0 0
    %379 = vperm.xlu0 %378, %v360
    %v380 = vpop.permute.xlu0 %379
    %v382 = vmul.f32 %v380, %v377
    %v383 = vadd.f32 %v375, %v382
    %s384 = scalar_lea.vmem [#allocation2], 376
    %v385 = vld [vmem:[%s384] sm:$0xff]
    %386 = vset.pattern.permute.xlu0 1
    %387 = vperm.xlu0 %386, %v360
    %v388 = vpop.permute.xlu0 %387
    %v390 = vmul.f32 %v388, %v385
    %v391 = vadd.f32 %v383, %v390
    %s392 = scalar_lea.vmem [#allocation2], 384
    %v393 = vld [vmem:[%s392] sm:$0xff]
    %394 = vset.pattern.permute.xlu0 2
    %395 = vperm.xlu0 %394, %v360
    %v396 = vpop.permute.xlu0 %395
    %v398 = vmul.f32 %v396, %v393
    %v399 = vadd.f32 %v391, %v398
    %s400 = scalar_lea.vmem [#allocation2], 392
    %v401 = vld [vmem:[%s400] sm:$0xff]
    %402 = vset.pattern.permute.xlu0 3
    %403 = vperm.xlu0 %402, %v360
    %v404 = vpop.permute.xlu0 %403
    %v406 = vmul.f32 %v404, %v401
    %v407 = vadd.f32 %v399, %v406
    %s408 = scalar_lea.vmem [#allocation2], 272
    %v409 = vld [vmem:[%s408] sm:$0xff]
    %s410 = scalar_lea.vmem [#allocation2], 280
    %v411 = vld [vmem:[%s410] sm:$0xff]
    %vm412 = vcmp.ge.f32.partialorder %v407, %v409
    %vm413 = vcmp.lt.f32.partialorder %v407, %v411
    %vm414 = vmand %vm412, %vm413
    %v415 = vsel %vm414, 1.0, 0.0
    %v416 = vsub.f32 %v407, %v409
    %s417 = scalar_lea.vmem [#allocation2], 288
    %v418 = vld [vmem:[%s417] sm:$0xff]
    %s419 = scalar_lea.vmem [#allocation2], 296
    %v420 = vld [vmem:[%s419] sm:$0xff]
    %s421 = scalar_lea.vmem [#allocation2], 304
    %v422 = vld [vmem:[%s421] sm:$0xff]
    %423 = vrot.lane.b32.xlu0 %v415, 127
    %v424 = vpop.permute.xlu0 %423
    %v425 = vmul.f32 %v416, %v420
    %v426 = vmul.f32 %v425, %v415
    %v427 = vsub.f32 %v418, %v407
    %v428 = vmul.f32 %v427, %v422
    %v429 = vmul.f32 %v428, %v424
    %v430 = vadd.f32 %v426, %v429
    %s431 = scalar_lea.vmem [#allocation2], 312
    %v432 = vld [vmem:[%s431] sm:$0xff]
    %s433 = scalar_lea.vmem [#allocation2], 320
    %v434 = vld [vmem:[%s433] sm:$0xff]
    %s435 = scalar_lea.vmem [#allocation2], 328
    %v436 = vld [vmem:[%s435] sm:$0xff]
    %437 = vrot.lane.b32.xlu0 %v430, 127
    %v438 = vpop.permute.xlu0 %437
    %v439 = vmul.f32 %v416, %v434
    %v440 = vmul.f32 %v439, %v430
    %v441 = vsub.f32 %v432, %v407
    %v442 = vmul.f32 %v441, %v436
    %v443 = vmul.f32 %v442, %v438
    %v444 = vadd.f32 %v440, %v443
    %s445 = scalar_lea.vmem [#allocation2], 336
    %v446 = vld [vmem:[%s445] sm:$0xff]
    %s447 = scalar_lea.vmem [#allocation2], 344
    %v448 = vld [vmem:[%s447] sm:$0xff]
    %s449 = scalar_lea.vmem [#allocation2], 352
    %v450 = vld [vmem:[%s449] sm:$0xff]
    %451 = vrot.lane.b32.xlu0 %v444, 127
    %v452 = vpop.permute.xlu0 %451
    %v453 = vmul.f32 %v416, %v448
    %v454 = vmul.f32 %v453, %v444
    %v455 = vsub.f32 %v446, %v407
    %v456 = vmul.f32 %v455, %v450
    %v457 = vmul.f32 %v456, %v452
    %v458 = vadd.f32 %v454, %v457
    %s459 = scalar_lea.vmem [#allocation2], 400
    %v460 = vld [vmem:[%s459] sm:$0xff]
    %vm461 = vcmp.gt.f32.partialorder %v460, 0.0
    %v462 = vsel %vm461, %v407, %v458
    %s463 = scalar_lea.vmem %s2, 256
    %v464 = vld [vmem:[%s463] sm:$0xff]
    %v465 = vld [vmem:[%s463 + $0x8] sm:$0xff]
    %v466 = vld [vmem:[%s463 + $0x10] sm:$0xff]
    %v467 = vld [vmem:[%s463 + $0x18] sm:$0xff]
    %v468 = vld [vmem:[%s463 + $0x20] sm:$0xff]
    %v469 = vld [vmem:[%s463 + $0x28] sm:$0xff]
    %v470 = vld [vmem:[%s463 + $0x30] sm:$0xff]
    %v471 = vld [vmem:[%s463 + $0x38] sm:$0xff]
    %v472 = vld [vmem:[%s463 + $0x40] sm:$0xff]
    %v473 = vld [vmem:[%s463 + $0x48] sm:$0xff]
    %v474 = vld [vmem:[%s463 + $0x50] sm:$0xff]
    %v475 = vld [vmem:[%s463 + $0x58] sm:$0xff]
    %v476 = vld [vmem:[%s463 + $0x60] sm:$0xff]
    %v477 = vld [vmem:[%s463 + $0x68] sm:$0xff]
    %v478 = vld [vmem:[%s463 + $0x70] sm:$0xff]
    %v479 = vld [vmem:[%s463 + $0x78] sm:$0xff]
    %480 = vmatprep.subr.mxu0 0.0
    %481 = vmatpush1.msra.mxu0 %v464
    %482 = vmatprep.subr.mxu0 0.0
    %483 = vmatpush1.msra.mxu0 %v465
    %484 = vmatprep.subr.mxu0 0.0
    %485 = vmatpush1.msra.mxu0 %v466
    %486 = vmatprep.subr.mxu0 0.0
    %487 = vmatpush1.msra.mxu0 %v467
    %488 = vmatprep.subr.mxu0 0.0
    %489 = vmatpush1.msra.mxu0 %v468
    %490 = vmatprep.subr.mxu0 0.0
    %491 = vmatpush1.msra.mxu0 %v469
    %492 = vmatprep.subr.mxu0 0.0
    %493 = vmatpush1.msra.mxu0 %v470
    %494 = vmatprep.subr.mxu0 0.0
    %495 = vmatpush1.msra.mxu0 %v471
    %496 = vmatprep.subr.mxu0 0.0
    %497 = vmatpush1.msra.mxu0 %v472
    %498 = vmatprep.subr.mxu0 0.0
    %499 = vmatpush1.msra.mxu0 %v473
    %500 = vmatprep.subr.mxu0 0.0
    %501 = vmatpush1.msra.mxu0 %v474
    %502 = vmatprep.subr.mxu0 0.0
    %503 = vmatpush1.msra.mxu0 %v475
    %504 = vmatprep.subr.mxu0 0.0
    %505 = vmatpush1.msra.mxu0 %v476
    %506 = vmatprep.subr.mxu0 0.0
    %507 = vmatpush1.msra.mxu0 %v477
    %508 = vmatprep.subr.mxu0 0.0
    %509 = vmatpush1.msra.mxu0 %v478
    %510 = vmatprep.subr.mxu0 0.0
    %511 = vmatpush1.msra.mxu0 %v479
    %512 = vmatprep.subr.mxu0 0.0
    %513 = vmatpush1.msra.mxu0 0.0
    %514 = vmatprep.subr.mxu0 0.0
    %515 = vmatpush1.msra.mxu0 0.0
    %516 = vmatprep.subr.mxu0 0.0
    %517 = vmatpush1.msra.mxu0 0.0
    %518 = vmatprep.subr.mxu0 0.0
    %519 = vmatpush1.msra.mxu0 0.0
    %520 = vmatprep.subr.mxu0 0.0
    %521 = vmatpush1.msra.mxu0 0.0
    %522 = vmatprep.subr.mxu0 0.0
    %523 = vmatpush1.msra.mxu0 0.0
    %524 = vmatprep.subr.mxu0 0.0
    %525 = vmatpush1.msra.mxu0 0.0
    %526 = vmatprep.subr.mxu0 0.0
    %527 = vmatpush1.msra.mxu0 0.0
    %528 = vmatprep.subr.mxu0 0.0
    %529 = vmatpush1.msra.mxu0 0.0
    %530 = vmatprep.subr.mxu0 0.0
    %531 = vmatpush1.msra.mxu0 0.0
    %532 = vmatprep.subr.mxu0 0.0
    %533 = vmatpush1.msra.mxu0 0.0
    %534 = vmatprep.subr.mxu0 0.0
    %535 = vmatpush1.msra.mxu0 0.0
    %536 = vmatprep.subr.mxu0 0.0
    %537 = vmatpush1.msra.mxu0 0.0
    %538 = vmatprep.subr.mxu0 0.0
    %539 = vmatpush1.msra.mxu0 0.0
    %540 = vmatprep.subr.mxu0 0.0
    %541 = vmatpush1.msra.mxu0 0.0
    %542 = vmatprep.subr.mxu0 0.0
    %543 = vmatpush1.msra.mxu0 0.0
    %544 = vmatprep.mubr.f32.mxu0 0.0
    %545 = vmatmul.mubr.f32.gmra.mrb[0].mxu0 %v462
    %v546 = vpop.f32.mrb[0].mxu0
    %v547 = vadd.f32 0.0, %v546
    %v548 = vpop.f32.mrb[0].mxu0
    %549 = vdwg.mxu0
    %551 = vrot.lane.b32.xlu0 %v547, 8
    %v552 = vpop.permute.xlu0 %551
    %vm554 = vcmask 97344
    %555 = vst.msk [vmem:[#allocation5] sm:$0xff] %vm554, %v552
    %s556 = scalar_lea.vmem [#allocation2], 496
    %v557 = vld [vmem:[%s556] sm:$0xff]
    %558 = vset.pattern.permute.xlu0 0
    %559 = vperm.xlu0 %558, %v547
    %v560 = vpop.permute.xlu0 %559
    %v562 = vmul.f32 %v560, %v557
    %s563 = scalar_lea.vmem [#allocation2], 504
    %v564 = vld [vmem:[%s563] sm:$0xff]
    %565 = vset.pattern.permute.xlu0 1
    %566 = vperm.xlu0 %565, %v547
    %v567 = vpop.permute.xlu0 %566
    %v569 = vmul.f32 %v567, %v564
    %v570 = vadd.f32 %v562, %v569
    %s571 = scalar_lea.vmem [#allocation2], 512
    %v572 = vld [vmem:[%s571] sm:$0xff]
    %573 = vset.pattern.permute.xlu0 2
    %574 = vperm.xlu0 %573, %v547
    %v575 = vpop.permute.xlu0 %574
    %v577 = vmul.f32 %v575, %v572
    %v578 = vadd.f32 %v570, %v577
    %s579 = scalar_lea.vmem [#allocation2], 520
    %v580 = vld [vmem:[%s579] sm:$0xff]
    %581 = vset.pattern.permute.xlu0 3
    %582 = vperm.xlu0 %581, %v547
    %v583 = vpop.permute.xlu0 %582
    %v585 = vmul.f32 %v583, %v580
    %v586 = vadd.f32 %v578, %v585
    %s587 = scalar_lea.vmem [#allocation2], 408
    %v588 = vld [vmem:[%s587] sm:$0xff]
    %s589 = scalar_lea.vmem [#allocation2], 416
    %v590 = vld [vmem:[%s589] sm:$0xff]
    %vm591 = vcmp.ge.f32.partialorder %v586, %v588
    %vm592 = vcmp.lt.f32.partialorder %v586, %v590
    %vm593 = vmand %vm591, %vm592
    %v594 = vsel %vm593, 1.0, 0.0
    %v595 = vsub.f32 %v586, %v588
    %s596 = scalar_lea.vmem [#allocation2], 424
    %v597 = vld [vmem:[%s596] sm:$0xff]
    %s598 = scalar_lea.vmem [#allocation2], 432
    %v599 = vld [vmem:[%s598] sm:$0xff]
    %s600 = scalar_lea.vmem [#allocation2], 440
    %v601 = vld [vmem:[%s600] sm:$0xff]
    %602 = vrot.lane.b32.xlu0 %v594, 127
    %v603 = vpop.permute.xlu0 %602
    %v604 = vmul.f32 %v595, %v599
    %v605 = vmul.f32 %v604, %v594
    %v606 = vsub.f32 %v597, %v586
    %v607 = vmul.f32 %v606, %v601
    %v608 = vmul.f32 %v607, %v603
    %v609 = vadd.f32 %v605, %v608
    %s610 = scalar_lea.vmem [#allocation2], 448
    %v611 = vld [vmem:[%s610] sm:$0xff]
    %s612 = scalar_lea.vmem [#allocation2], 456
    %v613 = vld [vmem:[%s612] sm:$0xff]
    %s614 = scalar_lea.vmem [#allocation2], 464
    %v615 = vld [vmem:[%s614] sm:$0xff]
    %616 = vrot.lane.b32.xlu0 %v609, 127
    %v617 = vpop.permute.xlu0 %616
    %v618 = vmul.f32 %v595, %v613
    %v619 = vmul.f32 %v618, %v609
    %v620 = vsub.f32 %v611, %v586
    %v621 = vmul.f32 %v620, %v615
    %v622 = vmul.f32 %v621, %v617
    %v623 = vadd.f32 %v619, %v622
    %s624 = scalar_lea.vmem [#allocation2], 472
    %v625 = vld [vmem:[%s624] sm:$0xff]
    %s626 = scalar_lea.vmem [#allocation2], 480
    %v627 = vld [vmem:[%s626] sm:$0xff]
    %s628 = scalar_lea.vmem [#allocation2], 488
    %v629 = vld [vmem:[%s628] sm:$0xff]
    %630 = vrot.lane.b32.xlu0 %v623, 127
    %v631 = vpop.permute.xlu0 %630
    %v632 = vmul.f32 %v595, %v627
    %v633 = vmul.f32 %v632, %v623
    %v634 = vsub.f32 %v625, %v586
    %v635 = vmul.f32 %v634, %v629
    %v636 = vmul.f32 %v635, %v631
    %v637 = vadd.f32 %v633, %v636
    %s638 = scalar_lea.vmem [#allocation2], 536
    %v639 = vld [vmem:[%s638] sm:$0xff]
    %vm640 = vcmp.gt.f32.partialorder %v639, 0.0
    %v641 = vsel %vm640, %v586, %v637
    %s642 = scalar_lea.vmem %s2, 384
    %v643 = vld [vmem:[%s642] sm:$0xff]
    %v644 = vld [vmem:[%s642 + $0x8] sm:$0xff]
    %v645 = vld [vmem:[%s642 + $0x10] sm:$0xff]
    %v646 = vld [vmem:[%s642 + $0x18] sm:$0xff]
    %v647 = vld [vmem:[%s642 + $0x20] sm:$0xff]
    %v648 = vld [vmem:[%s642 + $0x28] sm:$0xff]
    %v649 = vld [vmem:[%s642 + $0x30] sm:$0xff]
    %v650 = vld [vmem:[%s642 + $0x38] sm:$0xff]
    %v651 = vld [vmem:[%s642 + $0x40] sm:$0xff]
    %v652 = vld [vmem:[%s642 + $0x48] sm:$0xff]
    %v653 = vld [vmem:[%s642 + $0x50] sm:$0xff]
    %v654 = vld [vmem:[%s642 + $0x58] sm:$0xff]
    %v655 = vld [vmem:[%s642 + $0x60] sm:$0xff]
    %v656 = vld [vmem:[%s642 + $0x68] sm:$0xff]
    %v657 = vld [vmem:[%s642 + $0x70] sm:$0xff]
    %v658 = vld [vmem:[%s642 + $0x78] sm:$0xff]
    %659 = vmatprep.subr.mxu0 0.0
    %660 = vmatpush1.msra.mxu0 %v643
    %661 = vmatprep.subr.mxu0 0.0
    %662 = vmatpush1.msra.mxu0 %v644
    %663 = vmatprep.subr.mxu0 0.0
    %664 = vmatpush1.msra.mxu0 %v645
    %665 = vmatprep.subr.mxu0 0.0
    %666 = vmatpush1.msra.mxu0 %v646
    %667 = vmatprep.subr.mxu0 0.0
    %668 = vmatpush1.msra.mxu0 %v647
    %669 = vmatprep.subr.mxu0 0.0
    %670 = vmatpush1.msra.mxu0 %v648
    %671 = vmatprep.subr.mxu0 0.0
    %672 = vmatpush1.msra.mxu0 %v649
    %673 = vmatprep.subr.mxu0 0.0
    %674 = vmatpush1.msra.mxu0 %v650
    %675 = vmatprep.subr.mxu0 0.0
    %676 = vmatpush1.msra.mxu0 %v651
    %677 = vmatprep.subr.mxu0 0.0
    %678 = vmatpush1.msra.mxu0 %v652
    %679 = vmatprep.subr.mxu0 0.0
    %680 = vmatpush1.msra.mxu0 %v653
    %681 = vmatprep.subr.mxu0 0.0
    %682 = vmatpush1.msra.mxu0 %v654
    %683 = vmatprep.subr.mxu0 0.0
    %684 = vmatpush1.msra.mxu0 %v655
    %685 = vmatprep.subr.mxu0 0.0
    %686 = vmatpush1.msra.mxu0 %v656
    %687 = vmatprep.subr.mxu0 0.0
    %688 = vmatpush1.msra.mxu0 %v657
    %689 = vmatprep.subr.mxu0 0.0
    %690 = vmatpush1.msra.mxu0 %v658
    %691 = vmatprep.subr.mxu0 0.0
    %692 = vmatpush1.msra.mxu0 0.0
    %693 = vmatprep.subr.mxu0 0.0
    %694 = vmatpush1.msra.mxu0 0.0
    %695 = vmatprep.subr.mxu0 0.0
    %696 = vmatpush1.msra.mxu0 0.0
    %697 = vmatprep.subr.mxu0 0.0
    %698 = vmatpush1.msra.mxu0 0.0
    %699 = vmatprep.subr.mxu0 0.0
    %700 = vmatpush1.msra.mxu0 0.0
    %701 = vmatprep.subr.mxu0 0.0
    %702 = vmatpush1.msra.mxu0 0.0
    %703 = vmatprep.subr.mxu0 0.0
    %704 = vmatpush1.msra.mxu0 0.0
    %705 = vmatprep.subr.mxu0 0.0
    %706 = vmatpush1.msra.mxu0 0.0
    %707 = vmatprep.subr.mxu0 0.0
    %708 = vmatpush1.msra.mxu0 0.0
    %709 = vmatprep.subr.mxu0 0.0
    %710 = vmatpush1.msra.mxu0 0.0
    %711 = vmatprep.subr.mxu0 0.0
    %712 = vmatpush1.msra.mxu0 0.0
    %713 = vmatprep.subr.mxu0 0.0
    %714 = vmatpush1.msra.mxu0 0.0
    %715 = vmatprep.subr.mxu0 0.0
    %716 = vmatpush1.msra.mxu0 0.0
    %717 = vmatprep.subr.mxu0 0.0
    %718 = vmatpush1.msra.mxu0 0.0
    %719 = vmatprep.subr.mxu0 0.0
    %720 = vmatpush1.msra.mxu0 0.0
    %721 = vmatprep.subr.mxu0 0.0
    %722 = vmatpush1.msra.mxu0 0.0
    %723 = vmatprep.mubr.f32.mxu0 0.0
    %724 = vmatmul.mubr.f32.gmra.mrb[0].mxu0 %v641
    %v725 = vpop.f32.mrb[0].mxu0
    %v726 = vadd.f32 0.0, %v725
    %v727 = vpop.f32.mrb[0].mxu0
    %728 = vdwg.mxu0
    %730 = vrot.lane.b32.xlu0 %v726, 12
    %v731 = vpop.permute.xlu0 %730
    %vm733 = vcmask 113760
    %734 = vst.msk [vmem:[#allocation5] sm:$0xff] %vm733, %v731
    // Predicated region
    $region18: #{tpu_custom_call.1} parent=1 // pred_check
      _
    $region19: #{tpu_custom_call.1} parent=1 // pred_check_branch
      %736 = sbr.rel (0) target = $region21
    $region20: #{tpu_custom_call.1} parent=1 // pred_region
      %s738 = ssub.s32 128, 128
      %739 = vsyncadd [#allocation4], %s738
      %s741 = sshll.u32 [#allocation5], 4
      %s742 = int_to_ptr.vmem [resolvable:$true] %s741
      %744 = dma.vmem_to_hbm [thread:$0]  %s742, 128, %s3, [#allocation4]
    $region21: #{tpu_custom_call.1} parent=1 // pred_fallthru
      _
    // Predicated region
    $region22: #{tpu_custom_call.1} parent=1 // pred_check
      _
    $region23: #{tpu_custom_call.1} parent=1 // pred_check_branch
      %746 = sbr.rel (0) target = $region25
    $region24: #{tpu_custom_call.1} parent=1 // pred_region
      %747 = dma.done [#allocation4], 128
    $region25: #{tpu_custom_call.1} parent=1 // pred_fallthru
      _
    %748 = vsyncpa [#allocation3], 1
    %749 = vsyncpa [#allocation4], 1

</llo_original>
